<compile_context>
chip_gen: v6e
topology: v6e:2x2x1
jax: 0.10.0
libtpu: 0.0.40
codegen_flags: <defaults>
</compile_context>

<pallas_src>
import jax
import jax.numpy as jnp
from jax.experimental import pallas as pl
from jax.experimental.pallas import tpu as pltpu


def _round_up(x, m):
    return (x + m - 1) // m * m


# ---------------------------------------------------------------------------
# Pallas kernels
# ---------------------------------------------------------------------------
def _conv_relu_pool_kernel(p_ref, w_ref, b_ref, o_ref):
    """Fused conv-as-matmul + 2x2 max-pool + bias + ReLU.

    p_ref : (4, Kpad, TM) bf16  im2col patches, one plane per pool offset
    w_ref : (Coutp, Kpad) bf16
    b_ref : (Coutp, 1)    f32
    o_ref : (Coutp, TM)   f32   pooled, activated output (lane-dense along M)
    """
    w = w_ref[...]
    y0 = jnp.dot(w, p_ref[0], preferred_element_type=jnp.float32)
    y1 = jnp.dot(w, p_ref[1], preferred_element_type=jnp.float32)
    y2 = jnp.dot(w, p_ref[2], preferred_element_type=jnp.float32)
    y3 = jnp.dot(w, p_ref[3], preferred_element_type=jnp.float32)
    y = jnp.maximum(jnp.maximum(y0, y1), jnp.maximum(y2, y3))
    # pool(relu(conv + b)) == relu(max(conv) + b)  (bias constant per window)
    o_ref[...] = jnp.maximum(y + b_ref[...], 0.0).astype(o_ref.dtype)


def _mlp_kernel(x_ref, w1_ref, b1_ref, w2_ref, b2_ref, w3_ref, b3_ref, o_ref):
    """fc1+ReLU -> fc2+ReLU -> fc3 fused; bf16 operands, f32 accumulation."""
    h = jnp.dot(x_ref[...], w1_ref[...], preferred_element_type=jnp.float32)
    h = jnp.maximum(h + b1_ref[...], 0.0).astype(jnp.bfloat16)
    h = jnp.dot(h, w2_ref[...], preferred_element_type=jnp.float32)
    h = jnp.maximum(h + b2_ref[...], 0.0).astype(jnp.bfloat16)
    y = jnp.dot(h, w3_ref[...], preferred_element_type=jnp.float32)
    o_ref[...] = (y + b3_ref[...]).astype(o_ref.dtype)


# ---------------------------------------------------------------------------
# Conv layer: im2col glue (plain JAX, CNHW) + fused Pallas conv/relu/pool
# ---------------------------------------------------------------------------
def conv_relu_pool(x_cnhw, w, b, *, pad):
    """Conv2d(stride=1, padding=pad) + ReLU + MaxPool2d(2,2).

    Input/output are channel-major (C, N, H, W) to avoid full-tensor
    layout transposes between layers.
    """
    Cin, N, H, W = x_cnhw.shape
    Cout, _, KH, KW = w.shape
    Ho, Wo = H + 2 * pad - KH + 1, W + 2 * pad - KW + 1
    Hp, Wp = Ho // 2, Wo // 2
    K = Cin * KH * KW
    M = N * Hp * Wp

    xp = x_cnhw
    if pad:
        xp = jnp.pad(xp, ((0, 0), (0, 0), (pad, pad), (pad, pad)))
    xp = xp.astype(jnp.bfloat16)          # expand in bf16 -> half HBM traffic

    # stride-1 im2col; stacking at axis=1 gives K flattened in (Cin, KH, KW)
    # order directly (matches PyTorch weight.reshape(Cout, Cin*KH*KW)).
    cols = jnp.stack(
        [xp[:, :, i:i + Ho, j:j + Wo] for i in range(KH) for j in range(KW)],
        axis=1)                                      # (Cin, KH*KW, N, Ho, Wo)
    cols = cols.reshape(K, N, Ho, Wo)

    Kpad = _round_up(K, 8)                    # sublane-aligned K
    Coutp = _round_up(Cout, 8)                # full-sublane output/accumulator
    TM = min(2048, _round_up(M, 128))         # lane-dense M tile
    Mpad = _round_up(M, TM)

    # Single stacked patch tensor (4 pool offsets), one pad HLO, one DMA
    # stream into the kernel.
    p_stack = jnp.stack(
        [cols[:, :, dh:dh + 2 * Hp:2, dw:dw + 2 * Wp:2].reshape(K, M)
         for dh in range(2) for dw in range(2)], axis=0)        # (4, K, M)
    p_stack = jnp.pad(p_stack, ((0, 0), (0, Kpad - K), (0, Mpad - M)))

    w2d = jnp.pad(w.reshape(Cout, K),
                  ((0, Coutp - Cout), (0, Kpad - K))).astype(jnp.bfloat16)
    b2d = jnp.pad(b.reshape(Cout, 1).astype(jnp.float32),
                  ((0, Coutp - Cout), (0, 0)))

    out = pl.pallas_call(
        _conv_relu_pool_kernel,
        out_shape=jax.ShapeDtypeStruct((Coutp, Mpad), jnp.float32),
        grid=(Mpad // TM,),
        in_specs=[
            pl.BlockSpec((4, Kpad, TM), lambda m: (0, 0, m)),
            pl.BlockSpec((Coutp, Kpad), lambda m: (0, 0)),
            pl.BlockSpec((Coutp, 1), lambda m: (0, 0)),
        ],
        out_specs=pl.BlockSpec((Coutp, TM), lambda m: (0, m)),
        compiler_params=pltpu.CompilerParams(
            dimension_semantics=("parallel",)),
    )(p_stack, w2d, b2d)

    # (Cout, M) -> (Cout, N, Hp, Wp): already channel-major for next layer.
    return out[:Cout, :M].reshape(Cout, N, Hp, Wp)


# ---------------------------------------------------------------------------
# Fused fully-connected head (fc1+fc2+fc3) in a single Pallas call
# ---------------------------------------------------------------------------
def _pad2d(a, rows, cols, dtype):
    r, c = a.shape
    return jnp.pad(a, ((0, rows - r), (0, cols - c))).astype(dtype)


def mlp_head(x, fc1_w, fc1_b, fc2_w, fc2_b, fc3_w, fc3_b):
    M, K1 = x.shape                                   # (batch, 400)
    H1, H2, NO = fc1_w.shape[0], fc2_w.shape[0], fc3_w.shape[0]
    K1p = _round_up(K1, 128)                          # 400 -> 512, lane-dense
    H1p, H2p, NOp = (_round_up(H1, 128), _round_up(H2, 128),
                     _round_up(NO, 128))
    TM = min(512, _round_up(M, 8))                    # sublane-aligned rows
    Mp = _round_up(M, TM)

    bf, f32 = jnp.bfloat16, jnp.float32
    xpad = _pad2d(x, Mp, K1p, bf)
    w1 = _pad2d(fc1_w.T, K1p, H1p, bf)
    b1 = _pad2d(fc1_b.reshape(1, H1), 1, H1p, f32)
    w2 = _pad2d(fc2_w.T, H1p, H2p, bf)
    b2 = _pad2d(fc2_b.reshape(1, H2), 1, H2p, f32)
    w3 = _pad2d(fc3_w.T, H2p, NOp, bf)
    b3 = _pad2d(fc3_b.reshape(1, NO), 1, NOp, f32)

    out = pl.pallas_call(
        _mlp_kernel,
        out_shape=jax.ShapeDtypeStruct((Mp, NOp), jnp.float32),
        grid=(Mp // TM,),
        in_specs=[
            pl.BlockSpec((TM, K1p), lambda m: (m, 0)),
            pl.BlockSpec((K1p, H1p), lambda m: (0, 0)),
            pl.BlockSpec((1, H1p), lambda m: (0, 0)),
            pl.BlockSpec((H1p, H2p), lambda m: (0, 0)),
            pl.BlockSpec((1, H2p), lambda m: (0, 0)),
            pl.BlockSpec((H2p, NOp), lambda m: (0, 0)),
            pl.BlockSpec((1, NOp), lambda m: (0, 0)),
        ],
        out_specs=pl.BlockSpec((TM, NOp), lambda m: (m, 0)),
        compiler_params=pltpu.CompilerParams(
            dimension_semantics=("parallel",)),
    )(xpad, w1, b1, w2, b2, w3, b3)
    return out[:M, :NO]


# ---------------------------------------------------------------------------
# Full forward pass (mirrors Net.forward, NCHW in / (N, 10) out)
# ---------------------------------------------------------------------------
def net_forward(x_nchw, params):
    x = x_nchw.astype(jnp.float32)
    # One cheap layout switch to channel-major (Cin=1 -> essentially a reshape).
    x = jnp.transpose(x, (1, 0, 2, 3))                        # (1, N, 28, 28)
    # conv1: Conv2d(1, 6, 5, 1, 2) + ReLU + MaxPool(2,2)  -> (6, N, 14, 14)
    x = conv_relu_pool(x, params["conv1_w"], params["conv1_b"], pad=2)
    # conv2: Conv2d(6, 16, 5) + ReLU + MaxPool(2,2)       -> (16, N, 5, 5)
    x = conv_relu_pool(x, params["conv2_w"], params["conv2_b"], pad=0)
    # x.view(-1, 16*5*5): transpose the tiny (16, N, 5, 5) back to NCHW order.
    flat = jnp.transpose(x, (1, 0, 2, 3)).reshape(x.shape[1], 16 * 5 * 5)
    return mlp_head(flat,
                    params["fc1_w"], params["fc1_b"],
                    params["fc2_w"], params["fc2_b"],
                    params["fc3_w"], params["fc3_b"])


# ---------------------------------------------------------------------------
# Deterministic parameter init (PyTorch-shaped, PyTorch default-style bounds)
# ---------------------------------------------------------------------------
def init_params(key):
    ks = jax.random.split(key, 10)

    def u(k, shape, fan_in):
        bound = 1.0 / jnp.sqrt(float(fan_in))
        return jax.random.uniform(k, shape, jnp.float32, -bound, bound)

    return {
        "conv1_w": u(ks[0], (6, 1, 5, 5), 25),   "conv1_b": u(ks[1], (6,), 25),
        "conv2_w": u(ks[2], (16, 6, 5, 5), 150), "conv2_b": u(ks[3], (16,), 150),
        "fc1_w": u(ks[4], (120, 400), 400),      "fc1_b": u(ks[5], (120,), 400),
        "fc2_w": u(ks[6], (84, 120), 120),       "fc2_b": u(ks[7], (84,), 120),
        "fc3_w": u(ks[8], (10, 84), 84),         "fc3_b": u(ks[9], (10,), 84),
    }


if __name__ == "__main__":
    key = jax.random.PRNGKey(0)
    k_param, k_x = jax.random.split(key)
    params = init_params(k_param)

    # Input consistent with the 16*5*5 flatten: (batch, 1, 28, 28), NCHW.
    x = jax.random.normal(k_x, (2, 1, 28, 28), jnp.float32)

    out = jax.jit(net_forward)(x, params)
    out = jax.block_until_ready(out)
    assert out.shape == (2, 10) and out.dtype == jnp.float32
    print("KERNEL_OK")
</pallas_src>

<mosaic_0001>
module attributes {stable_mosaic.version = 11 : i64} {
  func.func @_conv_relu_pool_kernel(%arg0: i32, %arg1: memref<4x32x512xbf16, #tpu.memory_space<vmem>>, %arg2: memref<8x32xbf16, #tpu.memory_space<vmem>>, %arg3: memref<8x1xf32, #tpu.memory_space<vmem>>, %arg4: memref<8x512xf32, #tpu.memory_space<vmem>>) attributes {dimension_semantics = [#tpu.dimension_semantics<parallel>], iteration_bounds = array<i64: 1>, scalar_prefetch = 0 : i64, scratch_operands = 0 : i64, tpu.core_type = #tpu.core_type<tc>, window_params = [{transform_indices = @transform_0, window_bounds = array<i64: 4, 32, 512>}, {pipeline_mode = #tpu.pipeline_mode<synchronous>, transform_indices = @transform_1, window_bounds = array<i64: 8, 32>}, {pipeline_mode = #tpu.pipeline_mode<synchronous>, transform_indices = @transform_2, window_bounds = array<i64: 8, 1>}, {transform_indices = @transform_3, window_bounds = array<i64: 8, 512>}]} {
    %c0 = arith.constant 0 : index
    %c0_0 = arith.constant 0 : index
    %0 = vector.load %arg2[%c0, %c0_0] : memref<8x32xbf16, #tpu.memory_space<vmem>>, vector<8x32xbf16>
    %c0_1 = arith.constant 0 : index
    %c0_2 = arith.constant 0 : index
    %c0_3 = arith.constant 0 : index
    %1 = vector.load %arg1[%c0_1, %c0_2, %c0_3] : memref<4x32x512xbf16, #tpu.memory_space<vmem>>, vector<1x32x512xbf16>
    %2 = vector.shape_cast %1 : vector<1x32x512xbf16> to vector<32x512xbf16>
    %cst = arith.constant dense<0.000000e+00> : vector<8x512xf32>
    %3 = tpu.matmul %0, %2, %cst {dimension_numbers = #tpu.dot_dimension_numbers<[1], [0], [0], [1], [0, 0, 1, 1], [], []>} : vector<8x32xbf16>, vector<32x512xbf16>, vector<8x512xf32> -> vector<8x512xf32>
    %c1 = arith.constant 1 : index
    %c0_4 = arith.constant 0 : index
    %c0_5 = arith.constant 0 : index
    %4 = vector.load %arg1[%c1, %c0_4, %c0_5] : memref<4x32x512xbf16, #tpu.memory_space<vmem>>, vector<1x32x512xbf16>
    %5 = vector.shape_cast %4 : vector<1x32x512xbf16> to vector<32x512xbf16>
    %cst_6 = arith.constant dense<0.000000e+00> : vector<8x512xf32>
    %6 = tpu.matmul %0, %5, %cst_6 {dimension_numbers = #tpu.dot_dimension_numbers<[1], [0], [0], [1], [0, 0, 1, 1], [], []>} : vector<8x32xbf16>, vector<32x512xbf16>, vector<8x512xf32> -> vector<8x512xf32>
    %c2 = arith.constant 2 : index
    %c0_7 = arith.constant 0 : index
    %c0_8 = arith.constant 0 : index
    %7 = vector.load %arg1[%c2, %c0_7, %c0_8] : memref<4x32x512xbf16, #tpu.memory_space<vmem>>, vector<1x32x512xbf16>
    %8 = vector.shape_cast %7 : vector<1x32x512xbf16> to vector<32x512xbf16>
    %cst_9 = arith.constant dense<0.000000e+00> : vector<8x512xf32>
    %9 = tpu.matmul %0, %8, %cst_9 {dimension_numbers = #tpu.dot_dimension_numbers<[1], [0], [0], [1], [0, 0, 1, 1], [], []>} : vector<8x32xbf16>, vector<32x512xbf16>, vector<8x512xf32> -> vector<8x512xf32>
    %c3 = arith.constant 3 : index
    %c0_10 = arith.constant 0 : index
    %c0_11 = arith.constant 0 : index
    %10 = vector.load %arg1[%c3, %c0_10, %c0_11] : memref<4x32x512xbf16, #tpu.memory_space<vmem>>, vector<1x32x512xbf16>
    %11 = vector.shape_cast %10 : vector<1x32x512xbf16> to vector<32x512xbf16>
    %cst_12 = arith.constant dense<0.000000e+00> : vector<8x512xf32>
    %12 = tpu.matmul %0, %11, %cst_12 {dimension_numbers = #tpu.dot_dimension_numbers<[1], [0], [0], [1], [0, 0, 1, 1], [], []>} : vector<8x32xbf16>, vector<32x512xbf16>, vector<8x512xf32> -> vector<8x512xf32>
    %13 = arith.maximumf %3, %6 : vector<8x512xf32>
    %14 = arith.maximumf %9, %12 : vector<8x512xf32>
    %15 = arith.maximumf %13, %14 : vector<8x512xf32>
    %c0_13 = arith.constant 0 : index
    %c0_14 = arith.constant 0 : index
    %16 = vector.load %arg3[%c0_13, %c0_14] : memref<8x1xf32, #tpu.memory_space<vmem>>, vector<8x1xf32>
    %17 = vector.broadcast %16 : vector<8x1xf32> to vector<8x512xf32>
    %18 = arith.addf %15, %17 : vector<8x512xf32>
    %cst_15 = arith.constant 0.000000e+00 : f32
    %19 = vector.broadcast %cst_15 : f32 to vector<8x512xf32>
    %20 = arith.maximumf %18, %19 : vector<8x512xf32>
    %c0_16 = arith.constant 0 : index
    %c0_17 = arith.constant 0 : index
    %21 = vector.load %arg4[%c0_16, %c0_17] : memref<8x512xf32, #tpu.memory_space<vmem>>, vector<8x512xf32>
    tpu.vector_store %arg4[%c0_16, %c0_17], %20 {strides = array<i32>} : memref<8x512xf32, #tpu.memory_space<vmem>>, vector<8x512xf32>,
    return
  }
  func.func @transform_0(%arg0: i32) -> (i32, i32, i32) {
    %c0_i32 = arith.constant 0 : i32
    %c0_i32_0 = arith.constant 0 : i32
    %c0_i32_1 = arith.constant 0 : i32
    return %c0_i32, %c0_i32_0, %arg0 : i32, i32, i32
  }
  func.func @transform_1(%arg0: i32) -> (i32, i32) {
    %c0_i32 = arith.constant 0 : i32
    %c0_i32_0 = arith.constant 0 : i32
    %c0_i32_1 = arith.constant 0 : i32
    return %c0_i32, %c0_i32_0 : i32, i32
  }
  func.func @transform_2(%arg0: i32) -> (i32, i32) {
    %c0_i32 = arith.constant 0 : i32
    %c0_i32_0 = arith.constant 0 : i32
    %c0_i32_1 = arith.constant 0 : i32
    return %c0_i32, %c0_i32_0 : i32, i32
  }
  func.func @transform_3(%arg0: i32) -> (i32, i32) {
    %c0_i32 = arith.constant 0 : i32
    %c0_i32_0 = arith.constant 0 : i32
    return %c0_i32, %arg0 : i32, i32
  }
}

module attributes {stable_mosaic.version = 11 : i64} {
  func.func @_conv_relu_pool_kernel(%arg0: i32, %arg1: memref<4x152x128xbf16, #tpu.memory_space<vmem>>, %arg2: memref<16x152xbf16, #tpu.memory_space<vmem>>, %arg3: memref<16x1xf32, #tpu.memory_space<vmem>>, %arg4: memref<16x128xf32, #tpu.memory_space<vmem>>) attributes {dimension_semantics = [#tpu.dimension_semantics<parallel>], iteration_bounds = array<i64: 1>, scalar_prefetch = 0 : i64, scratch_operands = 0 : i64, tpu.core_type = #tpu.core_type<tc>, window_params = [{transform_indices = @transform_0, window_bounds = array<i64: 4, 152, 128>}, {pipeline_mode = #tpu.pipeline_mode<synchronous>, transform_indices = @transform_1, window_bounds = array<i64: 16, 152>}, {pipeline_mode = #tpu.pipeline_mode<synchronous>, transform_indices = @transform_2, window_bounds = array<i64: 16, 1>}, {transform_indices = @transform_3, window_bounds = array<i64: 16, 128>}]} {
    %c0 = arith.constant 0 : index
    %c0_0 = arith.constant 0 : index
    %0 = vector.load %arg2[%c0, %c0_0] : memref<16x152xbf16, #tpu.memory_space<vmem>>, vector<16x152xbf16>
    %c0_1 = arith.constant 0 : index
    %c0_2 = arith.constant 0 : index
    %c0_3 = arith.constant 0 : index
    %1 = vector.load %arg1[%c0_1, %c0_2, %c0_3] : memref<4x152x128xbf16, #tpu.memory_space<vmem>>, vector<1x152x128xbf16>
    %2 = vector.shape_cast %1 : vector<1x152x128xbf16> to vector<152x128xbf16>
    %cst = arith.constant dense<0.000000e+00> : vector<16x128xf32>
    %3 = tpu.matmul %0, %2, %cst {dimension_numbers = #tpu.dot_dimension_numbers<[1], [0], [0], [1], [0, 0, 1, 1], [], []>} : vector<16x152xbf16>, vector<152x128xbf16>, vector<16x128xf32> -> vector<16x128xf32>
    %c1 = arith.constant 1 : index
    %c0_4 = arith.constant 0 : index
    %c0_5 = arith.constant 0 : index
    %4 = vector.load %arg1[%c1, %c0_4, %c0_5] : memref<4x152x128xbf16, #tpu.memory_space<vmem>>, vector<1x152x128xbf16>
    %5 = vector.shape_cast %4 : vector<1x152x128xbf16> to vector<152x128xbf16>
    %cst_6 = arith.constant dense<0.000000e+00> : vector<16x128xf32>
    %6 = tpu.matmul %0, %5, %cst_6 {dimension_numbers = #tpu.dot_dimension_numbers<[1], [0], [0], [1], [0, 0, 1, 1], [], []>} : vector<16x152xbf16>, vector<152x128xbf16>, vector<16x128xf32> -> vector<16x128xf32>
    %c2 = arith.constant 2 : index
    %c0_7 = arith.constant 0 : index
    %c0_8 = arith.constant 0 : index
    %7 = vector.load %arg1[%c2, %c0_7, %c0_8] : memref<4x152x128xbf16, #tpu.memory_space<vmem>>, vector<1x152x128xbf16>
    %8 = vector.shape_cast %7 : vector<1x152x128xbf16> to vector<152x128xbf16>
    %cst_9 = arith.constant dense<0.000000e+00> : vector<16x128xf32>
    %9 = tpu.matmul %0, %8, %cst_9 {dimension_numbers = #tpu.dot_dimension_numbers<[1], [0], [0], [1], [0, 0, 1, 1], [], []>} : vector<16x152xbf16>, vector<152x128xbf16>, vector<16x128xf32> -> vector<16x128xf32>
    %c3 = arith.constant 3 : index
    %c0_10 = arith.constant 0 : index
    %c0_11 = arith.constant 0 : index
    %10 = vector.load %arg1[%c3, %c0_10, %c0_11] : memref<4x152x128xbf16, #tpu.memory_space<vmem>>, vector<1x152x128xbf16>
    %11 = vector.shape_cast %10 : vector<1x152x128xbf16> to vector<152x128xbf16>
    %cst_12 = arith.constant dense<0.000000e+00> : vector<16x128xf32>
    %12 = tpu.matmul %0, %11, %cst_12 {dimension_numbers = #tpu.dot_dimension_numbers<[1], [0], [0], [1], [0, 0, 1, 1], [], []>} : vector<16x152xbf16>, vector<152x128xbf16>, vector<16x128xf32> -> vector<16x128xf32>
    %13 = arith.maximumf %3, %6 : vector<16x128xf32>
    %14 = arith.maximumf %9, %12 : vector<16x128xf32>
    %15 = arith.maximumf %13, %14 : vector<16x128xf32>
    %c0_13 = arith.constant 0 : index
    %c0_14 = arith.constant 0 : index
    %16 = vector.load %arg3[%c0_13, %c0_14] : memref<16x1xf32, #tpu.memory_space<vmem>>, vector<16x1xf32>
    %17 = vector.broadcast %16 : vector<16x1xf32> to vector<16x128xf32>
    %18 = arith.addf %15, %17 : vector<16x128xf32>
    %cst_15 = arith.constant 0.000000e+00 : f32
    %19 = vector.broadcast %cst_15 : f32 to vector<16x128xf32>
    %20 = arith.maximumf %18, %19 : vector<16x128xf32>
    %c0_16 = arith.constant 0 : index
    %c0_17 = arith.constant 0 : index
    %21 = vector.load %arg4[%c0_16, %c0_17] : memref<16x128xf32, #tpu.memory_space<vmem>>, vector<16x128xf32>
    tpu.vector_store %arg4[%c0_16, %c0_17], %20 {strides = array<i32>} : memref<16x128xf32, #tpu.memory_space<vmem>>, vector<16x128xf32>,
    return
  }
  func.func @transform_0(%arg0: i32) -> (i32, i32, i32) {
    %c0_i32 = arith.constant 0 : i32
    %c0_i32_0 = arith.constant 0 : i32
    %c0_i32_1 = arith.constant 0 : i32
    return %c0_i32, %c0_i32_0, %arg0 : i32, i32, i32
  }
  func.func @transform_1(%arg0: i32) -> (i32, i32) {
    %c0_i32 = arith.constant 0 : i32
    %c0_i32_0 = arith.constant 0 : i32
    %c0_i32_1 = arith.constant 0 : i32
    return %c0_i32, %c0_i32_0 : i32, i32
  }
  func.func @transform_2(%arg0: i32) -> (i32, i32) {
    %c0_i32 = arith.constant 0 : i32
    %c0_i32_0 = arith.constant 0 : i32
    %c0_i32_1 = arith.constant 0 : i32
    return %c0_i32, %c0_i32_0 : i32, i32
  }
  func.func @transform_3(%arg0: i32) -> (i32, i32) {
    %c0_i32 = arith.constant 0 : i32
    %c0_i32_0 = arith.constant 0 : i32
    return %c0_i32, %arg0 : i32, i32
  }
}

module attributes {stable_mosaic.version = 11 : i64} {
  func.func @_mlp_kernel(%arg0: i32, %arg1: memref<8x512xbf16, #tpu.memory_space<vmem>>, %arg2: memref<512x128xbf16, #tpu.memory_space<vmem>>, %arg3: memref<1x128xf32, #tpu.memory_space<vmem>>, %arg4: memref<128x128xbf16, #tpu.memory_space<vmem>>, %arg5: memref<1x128xf32, #tpu.memory_space<vmem>>, %arg6: memref<128x128xbf16, #tpu.memory_space<vmem>>, %arg7: memref<1x128xf32, #tpu.memory_space<vmem>>, %arg8: memref<8x128xf32, #tpu.memory_space<vmem>>) attributes {dimension_semantics = [#tpu.dimension_semantics<parallel>], iteration_bounds = array<i64: 1>, scalar_prefetch = 0 : i64, scratch_operands = 0 : i64, tpu.core_type = #tpu.core_type<tc>, window_params = [{transform_indices = @transform_0, window_bounds = array<i64: 8, 512>}, {pipeline_mode = #tpu.pipeline_mode<synchronous>, transform_indices = @transform_1, window_bounds = array<i64: 512, 128>}, {pipeline_mode = #tpu.pipeline_mode<synchronous>, transform_indices = @transform_2, window_bounds = array<i64: 1, 128>}, {pipeline_mode = #tpu.pipeline_mode<synchronous>, transform_indices = @transform_3, window_bounds = array<i64: 128, 128>}, {pipeline_mode = #tpu.pipeline_mode<synchronous>, transform_indices = @transform_4, window_bounds = array<i64: 1, 128>}, {pipeline_mode = #tpu.pipeline_mode<synchronous>, transform_indices = @transform_5, window_bounds = array<i64: 128, 128>}, {pipeline_mode = #tpu.pipeline_mode<synchronous>, transform_indices = @transform_6, window_bounds = array<i64: 1, 128>}, {transform_indices = @transform_7, window_bounds = array<i64: 8, 128>}]} {
    %c0 = arith.constant 0 : index
    %c0_0 = arith.constant 0 : index
    %0 = vector.load %arg1[%c0, %c0_0] : memref<8x512xbf16, #tpu.memory_space<vmem>>, vector<8x512xbf16>
    %c0_1 = arith.constant 0 : index
    %c0_2 = arith.constant 0 : index
    %1 = vector.load %arg2[%c0_1, %c0_2] : memref<512x128xbf16, #tpu.memory_space<vmem>>, vector<512x128xbf16>
    %cst = arith.constant dense<0.000000e+00> : vector<8x128xf32>
    %2 = tpu.matmul %0, %1, %cst {dimension_numbers = #tpu.dot_dimension_numbers<[1], [0], [0], [1], [0, 0, 1, 1], [], []>} : vector<8x512xbf16>, vector<512x128xbf16>, vector<8x128xf32> -> vector<8x128xf32>
    %c0_3 = arith.constant 0 : index
    %c0_4 = arith.constant 0 : index
    %3 = vector.load %arg3[%c0_3, %c0_4] : memref<1x128xf32, #tpu.memory_space<vmem>>, vector<1x128xf32>
    %4 = vector.broadcast %3 : vector<1x128xf32> to vector<8x128xf32>
    %5 = arith.addf %2, %4 : vector<8x128xf32>
    %cst_5 = arith.constant 0.000000e+00 : f32
    %6 = vector.broadcast %cst_5 : f32 to vector<8x128xf32>
    %7 = arith.maximumf %5, %6 : vector<8x128xf32>
    %8 = arith.truncf %7 : vector<8x128xf32> to vector<8x128xbf16>
    %c0_6 = arith.constant 0 : index
    %c0_7 = arith.constant 0 : index
    %9 = vector.load %arg4[%c0_6, %c0_7] : memref<128x128xbf16, #tpu.memory_space<vmem>>, vector<128x128xbf16>
    %cst_8 = arith.constant dense<0.000000e+00> : vector<8x128xf32>
    %10 = tpu.matmul %8, %9, %cst_8 {dimension_numbers = #tpu.dot_dimension_numbers<[1], [0], [0], [1], [0, 0, 1, 1], [], []>} : vector<8x128xbf16>, vector<128x128xbf16>, vector<8x128xf32> -> vector<8x128xf32>
    %c0_9 = arith.constant 0 : index
    %c0_10 = arith.constant 0 : index
    %11 = vector.load %arg5[%c0_9, %c0_10] : memref<1x128xf32, #tpu.memory_space<vmem>>, vector<1x128xf32>
    %12 = vector.broadcast %11 : vector<1x128xf32> to vector<8x128xf32>
    %13 = arith.addf %10, %12 : vector<8x128xf32>
    %cst_11 = arith.constant 0.000000e+00 : f32
    %14 = vector.broadcast %cst_11 : f32 to vector<8x128xf32>
    %15 = arith.maximumf %13, %14 : vector<8x128xf32>
    %16 = arith.truncf %15 : vector<8x128xf32> to vector<8x128xbf16>
    %c0_12 = arith.constant 0 : index
    %c0_13 = arith.constant 0 : index
    %17 = vector.load %arg6[%c0_12, %c0_13] : memref<128x128xbf16, #tpu.memory_space<vmem>>, vector<128x128xbf16>
    %cst_14 = arith.constant dense<0.000000e+00> : vector<8x128xf32>
    %18 = tpu.matmul %16, %17, %cst_14 {dimension_numbers = #tpu.dot_dimension_numbers<[1], [0], [0], [1], [0, 0, 1, 1], [], []>} : vector<8x128xbf16>, vector<128x128xbf16>, vector<8x128xf32> -> vector<8x128xf32>
    %c0_15 = arith.constant 0 : index
    %c0_16 = arith.constant 0 : index
    %19 = vector.load %arg7[%c0_15, %c0_16] : memref<1x128xf32, #tpu.memory_space<vmem>>, vector<1x128xf32>
    %20 = vector.broadcast %19 : vector<1x128xf32> to vector<8x128xf32>
    %21 = arith.addf %18, %20 : vector<8x128xf32>
    %c0_17 = arith.constant 0 : index
    %c0_18 = arith.constant 0 : index
    %22 = vector.load %arg8[%c0_17, %c0_18] : memref<8x128xf32, #tpu.memory_space<vmem>>, vector<8x128xf32>
    tpu.vector_store %arg8[%c0_17, %c0_18], %21 {strides = array<i32>} : memref<8x128xf32, #tpu.memory_space<vmem>>, vector<8x128xf32>,
    return
  }
  func.func @transform_0(%arg0: i32) -> (i32, i32) {
    %c0_i32 = arith.constant 0 : i32
    %c0_i32_0 = arith.constant 0 : i32
    return %arg0, %c0_i32 : i32, i32
  }
  func.func @transform_1(%arg0: i32) -> (i32, i32) {
    %c0_i32 = arith.constant 0 : i32
    %c0_i32_0 = arith.constant 0 : i32
    %c0_i32_1 = arith.constant 0 : i32
    return %c0_i32, %c0_i32_0 : i32, i32
  }
  func.func @transform_2(%arg0: i32) -> (i32, i32) {
    %c0_i32 = arith.constant 0 : i32
    %c0_i32_0 = arith.constant 0 : i32
    %c0_i32_1 = arith.constant 0 : i32
    return %c0_i32, %c0_i32_0 : i32, i32
  }
  func.func @transform_3(%arg0: i32) -> (i32, i32) {
    %c0_i32 = arith.constant 0 : i32
    %c0_i32_0 = arith.constant 0 : i32
    %c0_i32_1 = arith.constant 0 : i32
    return %c0_i32, %c0_i32_0 : i32, i32
  }
  func.func @transform_4(%arg0: i32) -> (i32, i32) {
    %c0_i32 = arith.constant 0 : i32
    %c0_i32_0 = arith.constant 0 : i32
    %c0_i32_1 = arith.constant 0 : i32
    return %c0_i32, %c0_i32_0 : i32, i32
  }
  func.func @transform_5(%arg0: i32) -> (i32, i32) {
    %c0_i32 = arith.constant 0 : i32
    %c0_i32_0 = arith.constant 0 : i32
    %c0_i32_1 = arith.constant 0 : i32
    return %c0_i32, %c0_i32_0 : i32, i32
  }
  func.func @transform_6(%arg0: i32) -> (i32, i32) {
    %c0_i32 = arith.constant 0 : i32
    %c0_i32_0 = arith.constant 0 : i32
    %c0_i32_1 = arith.constant 0 : i32
    return %c0_i32, %c0_i32_0 : i32, i32
  }
  func.func @transform_7(%arg0: i32) -> (i32, i32) {
    %c0_i32 = arith.constant 0 : i32
    %c0_i32_0 = arith.constant 0 : i32
    return %arg0, %c0_i32 : i32, i32
  }
}

</mosaic_0001>

<llo_original>
// kernel: net_forward.3
$region0: #{net_forward.3}
  #allocation0 [shape = 'u32[]', space=smem, size = 0x4, offset = 0x4, fixed_abs, tag = 'smem constant byte address 0x4 - core index']
  #allocation1 [shape = 'u32[144,128]{1,0:T(1,128)}', space=vmem, size = 0x12000, scoped, tag = 'internal scratch']
  %s0 = inlined_call_operand.vmem [shape: bf16[4,32,512], index: 0, kind: input, shape index: {}]
  %s1 = inlined_call_operand.vmem [shape: bf16[8,32], index: 1, kind: input, shape index: {}]
  %s2 = inlined_call_operand.vmem [shape: f32[8,1], index: 2, kind: input, shape index: {}]
  %s3 = inlined_call_operand.vmem [shape: f32[8,512], index: 3, kind: output, shape index: {}]
  %s4 = sld [smem:[#allocation0]]
  $region22: #{net_forward.3} parent=0
    _
  %s6 = ssub.s32 1, %s4
  %s7 = scalar_select 0, %s6, %s4
  // Predicated region
  $region2: #{net_forward.3} parent=0 // pred_check
    _
  $region3: #{net_forward.3} parent=0 // pred_check_branch
    %9 = sbr.rel (0) target = $region5
  $region4: #{net_forward.3} parent=0 // pred_region
    _
  $region5: #{net_forward.3} parent=0 // pred_fallthru
    _
  // Predicated region
  $region6: #{net_forward.3} parent=0 // pred_check
    _
  $region7: #{net_forward.3} parent=0 // pred_check_branch
    %11 = sbr.rel (0) target = $region9
  $region8: #{net_forward.3} parent=0 // pred_region
    _
  $region9: #{net_forward.3} parent=0 // pred_fallthru
    _
  // Predicated region
  $region10: #{net_forward.3} parent=0 // pred_check
    _
  $region11: #{net_forward.3} parent=0 // pred_check_branch
    %13 = sbr.rel (0) target = $region13
  $region12: #{net_forward.3} parent=0 // pred_region
    _
  $region13: #{net_forward.3} parent=0 // pred_fallthru
    _
  %v15 = vld [vmem:[%s1] sm:$0xf]
  %v16 = vld [vmem:[%s0] sm:$0xff]
  %v17 = vld [vmem:[%s0 + $0x8] sm:$0xff]
  %v18 = vld [vmem:[%s0 + $0x10] sm:$0xff]
  %v19 = vld [vmem:[%s0 + $0x18] sm:$0xff]
  %v20 = vld [vmem:[%s0 + $0x20] sm:$0xff]
  %v21 = vld [vmem:[%s0 + $0x28] sm:$0xff]
  %v22 = vld [vmem:[%s0 + $0x30] sm:$0xff]
  %v23 = vld [vmem:[%s0 + $0x38] sm:$0xff]
  %v32 = vunpack.c.l.b16 %v16
  %v33 = vunpack.c.h.b16 %v16
  %v34 = vunpack.c.l.b16 %v17
  %v35 = vunpack.c.h.b16 %v17
  %v36 = vunpack.c.l.b16 %v18
  %v37 = vunpack.c.h.b16 %v18
  %v38 = vunpack.c.l.b16 %v19
  %v39 = vunpack.c.h.b16 %v19
  %v40 = vunpack.c.l.b16 %v20
  %v41 = vunpack.c.h.b16 %v20
  %v42 = vunpack.c.l.b16 %v21
  %v43 = vunpack.c.h.b16 %v21
  %v44 = vunpack.c.l.b16 %v22
  %v45 = vunpack.c.h.b16 %v22
  %v46 = vunpack.c.l.b16 %v23
  %v47 = vunpack.c.h.b16 %v23
  %v48 = vpack.c.b16 %v36, %v32
  %v49 = vpack.c.b16 %v37, %v33
  %v50 = vpack.c.b16 %v38, %v34
  %v51 = vpack.c.b16 %v39, %v35
  %v52 = vpack.c.b16 %v44, %v40
  %v53 = vpack.c.b16 %v45, %v41
  %v54 = vpack.c.b16 %v46, %v42
  %v55 = vpack.c.b16 %v47, %v43
  %vm64 = vcmask 261120
  %v66 = vsel %vm64, %v15, 0
  %68 = vmatprep.subr.bf16.mxu0 0
  %69 = vmatpush1.bf16.msra.mxu0 0
  %70 = vmatprep.subr.bf16.mxu0 0
  %71 = vmatpush1.bf16.msra.mxu0 0
  %72 = vmatprep.subr.bf16.mxu0 0
  %73 = vmatpush1.bf16.msra.mxu0 0
  %74 = vmatprep.subr.bf16.mxu0 0
  %75 = vmatpush1.bf16.msra.mxu0 0
  %76 = vmatprep.subr.bf16.mxu0 0
  %77 = vmatpush1.bf16.msra.mxu0 0
  %78 = vmatprep.subr.bf16.mxu0 0
  %79 = vmatpush1.bf16.msra.mxu0 0
  %80 = vmatprep.subr.bf16.mxu0 %v53
  %81 = vmatpush1.bf16.msra.mxu0 %v52
  %82 = vmatprep.subr.bf16.mxu0 %v49
  %83 = vmatpush1.bf16.msra.mxu0 %v48
  %84 = vmatprep.subr.bf16.mxu0 0
  %85 = vmatpush2.bf16.msra.mxu0 0
  %86 = vmatprep.subr.bf16.mxu0 0
  %87 = vmatpush2.bf16.msra.mxu0 0
  %88 = vmatprep.subr.bf16.mxu0 0
  %89 = vmatpush2.bf16.msra.mxu0 0
  %90 = vmatprep.subr.bf16.mxu0 0
  %91 = vmatpush2.bf16.msra.mxu0 0
  %92 = vmatprep.subr.bf16.mxu0 0
  %93 = vmatpush2.bf16.msra.mxu0 0
  %94 = vmatprep.subr.bf16.mxu0 0
  %95 = vmatpush2.bf16.msra.mxu0 0
  %96 = vmatprep.subr.bf16.mxu0 0
  %97 = vmatpush2.bf16.msra.mxu0 0
  %98 = vmatprep.subr.bf16.mxu0 0
  %99 = vmatpush2.bf16.msra.mxu0 0
  %100 = vmatprep.mubr.bf16.mxu0 0
  %101 = vmatmul.mubr.bf16.gmra.mxu0 %v66
  %v102 = vpop.f32.mrf.mxu0
  %v103 = vadd.f32 0.0, %v102
  %v104 = vpop.f32.mrf.mxu0
  %v105 = vadd.f32 0.0, %v104
  %v106 = vpop.f32.mrf.mxu0
  %v107 = vpop.f32.mrf.mxu0
  %108 = vdwg.mxu0
  %109 = vmatprep.subr.bf16.mxu0 0
  %110 = vmatpush1.bf16.msra.mxu0 0
  %111 = vmatprep.subr.bf16.mxu0 0
  %112 = vmatpush1.bf16.msra.mxu0 0
  %113 = vmatprep.subr.bf16.mxu0 0
  %114 = vmatpush1.bf16.msra.mxu0 0
  %115 = vmatprep.subr.bf16.mxu0 0
  %116 = vmatpush1.bf16.msra.mxu0 0
  %117 = vmatprep.subr.bf16.mxu0 0
  %118 = vmatpush1.bf16.msra.mxu0 0
  %119 = vmatprep.subr.bf16.mxu0 0
  %120 = vmatpush1.bf16.msra.mxu0 0
  %121 = vmatprep.subr.bf16.mxu0 %v55
  %122 = vmatpush1.bf16.msra.mxu0 %v54
  %123 = vmatprep.subr.bf16.mxu0 %v51
  %124 = vmatpush1.bf16.msra.mxu0 %v50
  %125 = vmatprep.subr.bf16.mxu0 0
  %126 = vmatpush2.bf16.msra.mxu0 0
  %127 = vmatprep.subr.bf16.mxu0 0
  %128 = vmatpush2.bf16.msra.mxu0 0
  %129 = vmatprep.subr.bf16.mxu0 0
  %130 = vmatpush2.bf16.msra.mxu0 0
  %131 = vmatprep.subr.bf16.mxu0 0
  %132 = vmatpush2.bf16.msra.mxu0 0
  %133 = vmatprep.subr.bf16.mxu0 0
  %134 = vmatpush2.bf16.msra.mxu0 0
  %135 = vmatprep.subr.bf16.mxu0 0
  %136 = vmatpush2.bf16.msra.mxu0 0
  %137 = vmatprep.subr.bf16.mxu0 0
  %138 = vmatpush2.bf16.msra.mxu0 0
  %139 = vmatprep.subr.bf16.mxu0 0
  %140 = vmatpush2.bf16.msra.mxu0 0
  %141 = vmatprep.mubr.bf16.mxu0 0
  %142 = vmatmul.mubr.bf16.gmra.mxu0 %v66
  %v143 = vpop.f32.mrf.mxu0
  %v144 = vadd.f32 0.0, %v143
  %v145 = vpop.f32.mrf.mxu0
  %v146 = vadd.f32 0.0, %v145
  %v147 = vpop.f32.mrf.mxu0
  %v148 = vpop.f32.mrf.mxu0
  %149 = vdwg.mxu0
  %s150 = scalar_lea.vmem %s0, 64
  %v151 = vld [vmem:[%s150] sm:$0xff]
  %v152 = vld [vmem:[%s150 + $0x8] sm:$0xff]
  %v153 = vld [vmem:[%s150 + $0x10] sm:$0xff]
  %v154 = vld [vmem:[%s150 + $0x18] sm:$0xff]
  %v155 = vld [vmem:[%s150 + $0x20] sm:$0xff]
  %v156 = vld [vmem:[%s150 + $0x28] sm:$0xff]
  %v157 = vld [vmem:[%s150 + $0x30] sm:$0xff]
  %v158 = vld [vmem:[%s150 + $0x38] sm:$0xff]
  %v167 = vunpack.c.l.b16 %v151
  %v168 = vunpack.c.h.b16 %v151
  %v169 = vunpack.c.l.b16 %v152
  %v170 = vunpack.c.h.b16 %v152
  %v171 = vunpack.c.l.b16 %v153
  %v172 = vunpack.c.h.b16 %v153
  %v173 = vunpack.c.l.b16 %v154
  %v174 = vunpack.c.h.b16 %v154
  %v175 = vunpack.c.l.b16 %v155
  %v176 = vunpack.c.h.b16 %v155
  %v177 = vunpack.c.l.b16 %v156
  %v178 = vunpack.c.h.b16 %v156
  %v179 = vunpack.c.l.b16 %v157
  %v180 = vunpack.c.h.b16 %v157
  %v181 = vunpack.c.l.b16 %v158
  %v182 = vunpack.c.h.b16 %v158
  %v183 = vpack.c.b16 %v171, %v167
  %v184 = vpack.c.b16 %v172, %v168
  %v185 = vpack.c.b16 %v173, %v169
  %v186 = vpack.c.b16 %v174, %v170
  %v187 = vpack.c.b16 %v179, %v175
  %v188 = vpack.c.b16 %v180, %v176
  %v189 = vpack.c.b16 %v181, %v177
  %v190 = vpack.c.b16 %v182, %v178
  %199 = vmatprep.subr.bf16.mxu0 0
  %200 = vmatpush1.bf16.msra.mxu0 0
  %201 = vmatprep.subr.bf16.mxu0 0
  %202 = vmatpush1.bf16.msra.mxu0 0
  %203 = vmatprep.subr.bf16.mxu0 0
  %204 = vmatpush1.bf16.msra.mxu0 0
  %205 = vmatprep.subr.bf16.mxu0 0
  %206 = vmatpush1.bf16.msra.mxu0 0
  %207 = vmatprep.subr.bf16.mxu0 0
  %208 = vmatpush1.bf16.msra.mxu0 0
  %209 = vmatprep.subr.bf16.mxu0 0
  %210 = vmatpush1.bf16.msra.mxu0 0
  %211 = vmatprep.subr.bf16.mxu0 %v188
  %212 = vmatpush1.bf16.msra.mxu0 %v187
  %213 = vmatprep.subr.bf16.mxu0 %v184
  %214 = vmatpush1.bf16.msra.mxu0 %v183
  %215 = vmatprep.subr.bf16.mxu0 0
  %216 = vmatpush2.bf16.msra.mxu0 0
  %217 = vmatprep.subr.bf16.mxu0 0
  %218 = vmatpush2.bf16.msra.mxu0 0
  %219 = vmatprep.subr.bf16.mxu0 0
  %220 = vmatpush2.bf16.msra.mxu0 0
  %221 = vmatprep.subr.bf16.mxu0 0
  %222 = vmatpush2.bf16.msra.mxu0 0
  %223 = vmatprep.subr.bf16.mxu0 0
  %224 = vmatpush2.bf16.msra.mxu0 0
  %225 = vmatprep.subr.bf16.mxu0 0
  %226 = vmatpush2.bf16.msra.mxu0 0
  %227 = vmatprep.subr.bf16.mxu0 0
  %228 = vmatpush2.bf16.msra.mxu0 0
  %229 = vmatprep.subr.bf16.mxu0 0
  %230 = vmatpush2.bf16.msra.mxu0 0
  %231 = vmatprep.mubr.bf16.mxu0 0
  %232 = vmatmul.mubr.bf16.gmra.mxu0 %v66
  %v233 = vpop.f32.mrf.mxu0
  %v234 = vadd.f32 0.0, %v233
  %v235 = vpop.f32.mrf.mxu0
  %v236 = vadd.f32 0.0, %v235
  %v237 = vpop.f32.mrf.mxu0
  %v238 = vpop.f32.mrf.mxu0
  %239 = vdwg.mxu0
  %240 = vmatprep.subr.bf16.mxu0 0
  %241 = vmatpush1.bf16.msra.mxu0 0
  %242 = vmatprep.subr.bf16.mxu0 0
  %243 = vmatpush1.bf16.msra.mxu0 0
  %244 = vmatprep.subr.bf16.mxu0 0
  %245 = vmatpush1.bf16.msra.mxu0 0
  %246 = vmatprep.subr.bf16.mxu0 0
  %247 = vmatpush1.bf16.msra.mxu0 0
  %248 = vmatprep.subr.bf16.mxu0 0
  %249 = vmatpush1.bf16.msra.mxu0 0
  %250 = vmatprep.subr.bf16.mxu0 0
  %251 = vmatpush1.bf16.msra.mxu0 0
  %252 = vmatprep.subr.bf16.mxu0 %v190
  %253 = vmatpush1.bf16.msra.mxu0 %v189
  %254 = vmatprep.subr.bf16.mxu0 %v186
  %255 = vmatpush1.bf16.msra.mxu0 %v185
  %256 = vmatprep.subr.bf16.mxu0 0
  %257 = vmatpush2.bf16.msra.mxu0 0
  %258 = vmatprep.subr.bf16.mxu0 0
  %259 = vmatpush2.bf16.msra.mxu0 0
  %260 = vmatprep.subr.bf16.mxu0 0
  %261 = vmatpush2.bf16.msra.mxu0 0
  %262 = vmatprep.subr.bf16.mxu0 0
  %263 = vmatpush2.bf16.msra.mxu0 0
  %264 = vmatprep.subr.bf16.mxu0 0
  %265 = vmatpush2.bf16.msra.mxu0 0
  %266 = vmatprep.subr.bf16.mxu0 0
  %267 = vmatpush2.bf16.msra.mxu0 0
  %268 = vmatprep.subr.bf16.mxu0 0
  %269 = vmatpush2.bf16.msra.mxu0 0
  %270 = vmatprep.subr.bf16.mxu0 0
  %271 = vmatpush2.bf16.msra.mxu0 0
  %272 = vmatprep.mubr.bf16.mxu0 0
  %273 = vmatmul.mubr.bf16.gmra.mxu0 %v66
  %v274 = vpop.f32.mrf.mxu0
  %v275 = vadd.f32 0.0, %v274
  %v276 = vpop.f32.mrf.mxu0
  %v277 = vadd.f32 0.0, %v276
  %v278 = vpop.f32.mrf.mxu0
  %v279 = vpop.f32.mrf.mxu0
  %280 = vdwg.mxu0
  %s281 = scalar_lea.vmem %s0, 128
  %v282 = vld [vmem:[%s281] sm:$0xff]
  %v283 = vld [vmem:[%s281 + $0x8] sm:$0xff]
  %v284 = vld [vmem:[%s281 + $0x10] sm:$0xff]
  %v285 = vld [vmem:[%s281 + $0x18] sm:$0xff]
  %v286 = vld [vmem:[%s281 + $0x20] sm:$0xff]
  %v287 = vld [vmem:[%s281 + $0x28] sm:$0xff]
  %v288 = vld [vmem:[%s281 + $0x30] sm:$0xff]
  %v289 = vld [vmem:[%s281 + $0x38] sm:$0xff]
  %v298 = vunpack.c.l.b16 %v282
  %v299 = vunpack.c.h.b16 %v282
  %v300 = vunpack.c.l.b16 %v283
  %v301 = vunpack.c.h.b16 %v283
  %v302 = vunpack.c.l.b16 %v284
  %v303 = vunpack.c.h.b16 %v284
  %v304 = vunpack.c.l.b16 %v285
  %v305 = vunpack.c.h.b16 %v285
  %v306 = vunpack.c.l.b16 %v286
  %v307 = vunpack.c.h.b16 %v286
  %v308 = vunpack.c.l.b16 %v287
  %v309 = vunpack.c.h.b16 %v287
  %v310 = vunpack.c.l.b16 %v288
  %v311 = vunpack.c.h.b16 %v288
  %v312 = vunpack.c.l.b16 %v289
  %v313 = vunpack.c.h.b16 %v289
  %v314 = vpack.c.b16 %v302, %v298
  %v315 = vpack.c.b16 %v303, %v299
  %v316 = vpack.c.b16 %v304, %v300
  %v317 = vpack.c.b16 %v305, %v301
  %v318 = vpack.c.b16 %v310, %v306
  %v319 = vpack.c.b16 %v311, %v307
  %v320 = vpack.c.b16 %v312, %v308
  %v321 = vpack.c.b16 %v313, %v309
  %330 = vmatprep.subr.bf16.mxu0 0
  %331 = vmatpush1.bf16.msra.mxu0 0
  %332 = vmatprep.subr.bf16.mxu0 0
  %333 = vmatpush1.bf16.msra.mxu0 0
  %334 = vmatprep.subr.bf16.mxu0 0
  %335 = vmatpush1.bf16.msra.mxu0 0
  %336 = vmatprep.subr.bf16.mxu0 0
  %337 = vmatpush1.bf16.msra.mxu0 0
  %338 = vmatprep.subr.bf16.mxu0 0
  %339 = vmatpush1.bf16.msra.mxu0 0
  %340 = vmatprep.subr.bf16.mxu0 0
  %341 = vmatpush1.bf16.msra.mxu0 0
  %342 = vmatprep.subr.bf16.mxu0 %v319
  %343 = vmatpush1.bf16.msra.mxu0 %v318
  %344 = vmatprep.subr.bf16.mxu0 %v315
  %345 = vmatpush1.bf16.msra.mxu0 %v314
  %346 = vmatprep.subr.bf16.mxu0 0
  %347 = vmatpush2.bf16.msra.mxu0 0
  %348 = vmatprep.subr.bf16.mxu0 0
  %349 = vmatpush2.bf16.msra.mxu0 0
  %350 = vmatprep.subr.bf16.mxu0 0
  %351 = vmatpush2.bf16.msra.mxu0 0
  %352 = vmatprep.subr.bf16.mxu0 0
  %353 = vmatpush2.bf16.msra.mxu0 0
  %354 = vmatprep.subr.bf16.mxu0 0
  %355 = vmatpush2.bf16.msra.mxu0 0
  %356 = vmatprep.subr.bf16.mxu0 0
  %357 = vmatpush2.bf16.msra.mxu0 0
  %358 = vmatprep.subr.bf16.mxu0 0
  %359 = vmatpush2.bf16.msra.mxu0 0
  %360 = vmatprep.subr.bf16.mxu0 0
  %361 = vmatpush2.bf16.msra.mxu0 0
  %362 = vmatprep.mubr.bf16.mxu0 0
  %363 = vmatmul.mubr.bf16.gmra.mxu0 %v66
  %v364 = vpop.f32.mrf.mxu0
  %v365 = vadd.f32 0.0, %v364
  %v366 = vpop.f32.mrf.mxu0
  %v367 = vadd.f32 0.0, %v366
  %v368 = vpop.f32.mrf.mxu0
  %v369 = vpop.f32.mrf.mxu0
  %370 = vdwg.mxu0
  %371 = vmatprep.subr.bf16.mxu0 0
  %372 = vmatpush1.bf16.msra.mxu0 0
  %373 = vmatprep.subr.bf16.mxu0 0
  %374 = vmatpush1.bf16.msra.mxu0 0
  %375 = vmatprep.subr.bf16.mxu0 0
  %376 = vmatpush1.bf16.msra.mxu0 0
  %377 = vmatprep.subr.bf16.mxu0 0
  %378 = vmatpush1.bf16.msra.mxu0 0
  %379 = vmatprep.subr.bf16.mxu0 0
  %380 = vmatpush1.bf16.msra.mxu0 0
  %381 = vmatprep.subr.bf16.mxu0 0
  %382 = vmatpush1.bf16.msra.mxu0 0
  %383 = vmatprep.subr.bf16.mxu0 %v321
  %384 = vmatpush1.bf16.msra.mxu0 %v320
  %385 = vmatprep.subr.bf16.mxu0 %v317
  %386 = vmatpush1.bf16.msra.mxu0 %v316
  %387 = vmatprep.subr.bf16.mxu0 0
  %388 = vmatpush2.bf16.msra.mxu0 0
  %389 = vmatprep.subr.bf16.mxu0 0
  %390 = vmatpush2.bf16.msra.mxu0 0
  %391 = vmatprep.subr.bf16.mxu0 0
  %392 = vmatpush2.bf16.msra.mxu0 0
  %393 = vmatprep.subr.bf16.mxu0 0
  %394 = vmatpush2.bf16.msra.mxu0 0
  %395 = vmatprep.subr.bf16.mxu0 0
  %396 = vmatpush2.bf16.msra.mxu0 0
  %397 = vmatprep.subr.bf16.mxu0 0
  %398 = vmatpush2.bf16.msra.mxu0 0
  %399 = vmatprep.subr.bf16.mxu0 0
  %400 = vmatpush2.bf16.msra.mxu0 0
  %401 = vmatprep.subr.bf16.mxu0 0
  %402 = vmatpush2.bf16.msra.mxu0 0
  %403 = vmatprep.mubr.bf16.mxu0 0
  %404 = vmatmul.mubr.bf16.gmra.mxu0 %v66
  %v405 = vpop.f32.mrf.mxu0
  %v406 = vadd.f32 0.0, %v405
  %v407 = vpop.f32.mrf.mxu0
  %v408 = vadd.f32 0.0, %v407
  %v409 = vpop.f32.mrf.mxu0
  %v410 = vpop.f32.mrf.mxu0
  %411 = vdwg.mxu0
  %s412 = scalar_lea.vmem %s0, 192
  %v413 = vld [vmem:[%s412] sm:$0xff]
  %v414 = vld [vmem:[%s412 + $0x8] sm:$0xff]
  %v415 = vld [vmem:[%s412 + $0x10] sm:$0xff]
  %v416 = vld [vmem:[%s412 + $0x18] sm:$0xff]
  %v417 = vld [vmem:[%s412 + $0x20] sm:$0xff]
  %v418 = vld [vmem:[%s412 + $0x28] sm:$0xff]
  %v419 = vld [vmem:[%s412 + $0x30] sm:$0xff]
  %v420 = vld [vmem:[%s412 + $0x38] sm:$0xff]
  %v429 = vunpack.c.l.b16 %v413
  %v430 = vunpack.c.h.b16 %v413
  %v431 = vunpack.c.l.b16 %v414
  %v432 = vunpack.c.h.b16 %v414
  %v433 = vunpack.c.l.b16 %v415
  %v434 = vunpack.c.h.b16 %v415
  %v435 = vunpack.c.l.b16 %v416
  %v436 = vunpack.c.h.b16 %v416
  %v437 = vunpack.c.l.b16 %v417
  %v438 = vunpack.c.h.b16 %v417
  %v439 = vunpack.c.l.b16 %v418
  %v440 = vunpack.c.h.b16 %v418
  %v441 = vunpack.c.l.b16 %v419
  %v442 = vunpack.c.h.b16 %v419
  %v443 = vunpack.c.l.b16 %v420
  %v444 = vunpack.c.h.b16 %v420
  %v445 = vpack.c.b16 %v433, %v429
  %v446 = vpack.c.b16 %v434, %v430
  %v447 = vpack.c.b16 %v435, %v431
  %v448 = vpack.c.b16 %v436, %v432
  %v449 = vpack.c.b16 %v441, %v437
  %v450 = vpack.c.b16 %v442, %v438
  %v451 = vpack.c.b16 %v443, %v439
  %v452 = vpack.c.b16 %v444, %v440
  %461 = vmatprep.subr.bf16.mxu0 0
  %462 = vmatpush1.bf16.msra.mxu0 0
  %463 = vmatprep.subr.bf16.mxu0 0
  %464 = vmatpush1.bf16.msra.mxu0 0
  %465 = vmatprep.subr.bf16.mxu0 0
  %466 = vmatpush1.bf16.msra.mxu0 0
  %467 = vmatprep.subr.bf16.mxu0 0
  %468 = vmatpush1.bf16.msra.mxu0 0
  %469 = vmatprep.subr.bf16.mxu0 0
  %470 = vmatpush1.bf16.msra.mxu0 0
  %471 = vmatprep.subr.bf16.mxu0 0
  %472 = vmatpush1.bf16.msra.mxu0 0
  %473 = vmatprep.subr.bf16.mxu0 %v450
  %474 = vmatpush1.bf16.msra.mxu0 %v449
  %475 = vmatprep.subr.bf16.mxu0 %v446
  %476 = vmatpush1.bf16.msra.mxu0 %v445
  %477 = vmatprep.subr.bf16.mxu0 0
  %478 = vmatpush2.bf16.msra.mxu0 0
  %479 = vmatprep.subr.bf16.mxu0 0
  %480 = vmatpush2.bf16.msra.mxu0 0
  %481 = vmatprep.subr.bf16.mxu0 0
  %482 = vmatpush2.bf16.msra.mxu0 0
  %483 = vmatprep.subr.bf16.mxu0 0
  %484 = vmatpush2.bf16.msra.mxu0 0
  %485 = vmatprep.subr.bf16.mxu0 0
  %486 = vmatpush2.bf16.msra.mxu0 0
  %487 = vmatprep.subr.bf16.mxu0 0
  %488 = vmatpush2.bf16.msra.mxu0 0
  %489 = vmatprep.subr.bf16.mxu0 0
  %490 = vmatpush2.bf16.msra.mxu0 0
  %491 = vmatprep.subr.bf16.mxu0 0
  %492 = vmatpush2.bf16.msra.mxu0 0
  %493 = vmatprep.mubr.bf16.mxu0 0
  %494 = vmatmul.mubr.bf16.gmra.mxu0 %v66
  %v495 = vpop.f32.mrf.mxu0
  %v496 = vadd.f32 0.0, %v495
  %v497 = vpop.f32.mrf.mxu0
  %v498 = vadd.f32 0.0, %v497
  %v499 = vpop.f32.mrf.mxu0
  %v500 = vpop.f32.mrf.mxu0
  %501 = vdwg.mxu0
  %502 = vmatprep.subr.bf16.mxu0 0
  %503 = vmatpush1.bf16.msra.mxu0 0
  %504 = vmatprep.subr.bf16.mxu0 0
  %505 = vmatpush1.bf16.msra.mxu0 0
  %506 = vmatprep.subr.bf16.mxu0 0
  %507 = vmatpush1.bf16.msra.mxu0 0
  %508 = vmatprep.subr.bf16.mxu0 0
  %509 = vmatpush1.bf16.msra.mxu0 0
  %510 = vmatprep.subr.bf16.mxu0 0
  %511 = vmatpush1.bf16.msra.mxu0 0
  %512 = vmatprep.subr.bf16.mxu0 0
  %513 = vmatpush1.bf16.msra.mxu0 0
  %514 = vmatprep.subr.bf16.mxu0 %v452
  %515 = vmatpush1.bf16.msra.mxu0 %v451
  %516 = vmatprep.subr.bf16.mxu0 %v448
  %517 = vmatpush1.bf16.msra.mxu0 %v447
  %518 = vmatprep.subr.bf16.mxu0 0
  %519 = vmatpush2.bf16.msra.mxu0 0
  %520 = vmatprep.subr.bf16.mxu0 0
  %521 = vmatpush2.bf16.msra.mxu0 0
  %522 = vmatprep.subr.bf16.mxu0 0
  %523 = vmatpush2.bf16.msra.mxu0 0
  %524 = vmatprep.subr.bf16.mxu0 0
  %525 = vmatpush2.bf16.msra.mxu0 0
  %526 = vmatprep.subr.bf16.mxu0 0
  %527 = vmatpush2.bf16.msra.mxu0 0
  %528 = vmatprep.subr.bf16.mxu0 0
  %529 = vmatpush2.bf16.msra.mxu0 0
  %530 = vmatprep.subr.bf16.mxu0 0
  %531 = vmatpush2.bf16.msra.mxu0 0
  %532 = vmatprep.subr.bf16.mxu0 0
  %533 = vmatpush2.bf16.msra.mxu0 0
  %534 = vmatprep.mubr.bf16.mxu0 0
  %535 = vmatmul.mubr.bf16.gmra.mxu0 %v66
  %v536 = vpop.f32.mrf.mxu0
  %v537 = vadd.f32 0.0, %v536
  %v538 = vpop.f32.mrf.mxu0
  %v539 = vadd.f32 0.0, %v538
  %v540 = vpop.f32.mrf.mxu0
  %v541 = vpop.f32.mrf.mxu0
  %542 = vdwg.mxu0
  %v543 = vmax.f32 %v103, %v234
  %v544 = vmax.f32 %v105, %v236
  %v545 = vmax.f32 %v144, %v275
  %v546 = vmax.f32 %v146, %v277
  %v547 = vmax.f32 %v365, %v496
  %v548 = vmax.f32 %v367, %v498
  %v549 = vmax.f32 %v406, %v537
  %v550 = vmax.f32 %v408, %v539
  %v551 = vmax.f32 %v543, %v547
  %v552 = vmax.f32 %v544, %v548
  %v553 = vmax.f32 %v545, %v549
  %v554 = vmax.f32 %v546, %v550
  %v555 = vld [vmem:[%s2] sm:$0xff]
  %557 = vset.pattern.permute.xlu0 0
  %558 = vperm.xlu0 %557, %v555
  %v559 = vpop.permute.xlu0 %558
  %v561 = vadd.f32 %v551, %v559
  %v562 = vadd.f32 %v552, %v559
  %v563 = vadd.f32 %v553, %v559
  %v564 = vadd.f32 %v554, %v559
  %v565 = vmax.f32 %v561, 0.0
  %v566 = vmax.f32 %v562, 0.0
  %v567 = vmax.f32 %v563, 0.0
  %v568 = vmax.f32 %v564, 0.0
  %569 = vst [vmem:[%s3] sm:$0xff] %v565
  %570 = vst [vmem:[%s3 + $0x8] sm:$0xff] %v566
  %571 = vst [vmem:[%s3 + $0x10] sm:$0xff] %v567
  %572 = vst [vmem:[%s3 + $0x18] sm:$0xff] %v568
  // Predicated region
  $region14: #{net_forward.3} parent=0 // pred_check
    _
  $region15: #{net_forward.3} parent=0 // pred_check_branch
    %574 = sbr.rel (0) target = $region17
  $region16: #{net_forward.3} parent=0 // pred_region
    _
  $region17: #{net_forward.3} parent=0 // pred_fallthru
    _
  // Predicated region
  $region18: #{net_forward.3} parent=0 // pred_check
    _
  $region19: #{net_forward.3} parent=0 // pred_check_branch
    %576 = sbr.rel (0) target = $region21
  $region20: #{net_forward.3} parent=0 // pred_region
    _
  $region21: #{net_forward.3} parent=0 // pred_fallthru
    _

// kernel: net_forward.4
$region0: #{net_forward.4}
  #allocation0 [shape = 'u32[]', space=smem, size = 0x4, offset = 0x4, fixed_abs, tag = 'smem constant byte address 0x4 - core index']
  #allocation1 [shape = 'u32[144,128]{1,0:T(1,128)}', space=vmem, size = 0x12000, scoped, tag = 'internal scratch']
  %s0 = inlined_call_operand.vmem [shape: bf16[4,152,128], index: 0, kind: input, shape index: {}]
  %s1 = inlined_call_operand.vmem [shape: bf16[16,152], index: 1, kind: input, shape index: {}]
  %s2 = inlined_call_operand.vmem [shape: f32[16,1], index: 2, kind: input, shape index: {}]
  %s3 = inlined_call_operand.vmem [shape: f32[16,128], index: 3, kind: output, shape index: {}]
  %s4 = sld [smem:[#allocation0]]
  $region22: #{net_forward.4} parent=0
    _
  %s6 = ssub.s32 1, %s4
  %s7 = scalar_select 0, %s6, %s4
  // Predicated region
  $region2: #{net_forward.4} parent=0 // pred_check
    _
  $region3: #{net_forward.4} parent=0 // pred_check_branch
    %9 = sbr.rel (0) target = $region5
  $region4: #{net_forward.4} parent=0 // pred_region
    _
  $region5: #{net_forward.4} parent=0 // pred_fallthru
    _
  // Predicated region
  $region6: #{net_forward.4} parent=0 // pred_check
    _
  $region7: #{net_forward.4} parent=0 // pred_check_branch
    %11 = sbr.rel (0) target = $region9
  $region8: #{net_forward.4} parent=0 // pred_region
    _
  $region9: #{net_forward.4} parent=0 // pred_fallthru
    _
  // Predicated region
  $region10: #{net_forward.4} parent=0 // pred_check
    _
  $region11: #{net_forward.4} parent=0 // pred_check_branch
    %13 = sbr.rel (0) target = $region13
  $region12: #{net_forward.4} parent=0 // pred_region
    _
  $region13: #{net_forward.4} parent=0 // pred_fallthru
    _
  %v15 = vld [vmem:[%s1] sm:$0xff]
  %v16 = vld [vmem:[%s1 + $0x8] sm:$0xff]
  %v17 = vld [vmem:[%s0] sm:$0xf]
  %v18 = vld [vmem:[%s0 + $0x4] sm:$0xf]
  %v19 = vld [vmem:[%s0 + $0x8] sm:$0xf]
  %v20 = vld [vmem:[%s0 + $0xc] sm:$0xf]
  %v21 = vld [vmem:[%s0 + $0x10] sm:$0xf]
  %v22 = vld [vmem:[%s0 + $0x14] sm:$0xf]
  %v23 = vld [vmem:[%s0 + $0x18] sm:$0xf]
  %v24 = vld [vmem:[%s0 + $0x1c] sm:$0xf]
  %v25 = vld [vmem:[%s0 + $0x20] sm:$0xf]
  %v26 = vld [vmem:[%s0 + $0x24] sm:$0xf]
  %v27 = vld [vmem:[%s0 + $0x28] sm:$0xf]
  %v28 = vld [vmem:[%s0 + $0x2c] sm:$0xf]
  %v29 = vld [vmem:[%s0 + $0x30] sm:$0xf]
  %v30 = vld [vmem:[%s0 + $0x34] sm:$0xf]
  %v31 = vld [vmem:[%s0 + $0x38] sm:$0xf]
  %v32 = vld [vmem:[%s0 + $0x3c] sm:$0xf]
  %v33 = vld [vmem:[%s0 + $0x40] sm:$0xf]
  %v34 = vld [vmem:[%s0 + $0x44] sm:$0xf]
  %v35 = vld [vmem:[%s0 + $0x48] sm:$0xf]
  %v38 = vunpack.c.l.b16 %v15
  %v39 = vunpack.c.h.b16 %v15
  %v40 = vunpack.c.l.b16 %v16
  %v41 = vunpack.c.h.b16 %v16
  %v42 = vpack.c.b16 %v40, %v38
  %v43 = vpack.c.b16 %v41, %v39
  %v64 = vunpack.c.l.b16 %v17
  %v65 = vunpack.c.l.b16 %v18
  %v66 = vunpack.c.l.b16 %v19
  %v67 = vunpack.c.l.b16 %v20
  %v68 = vunpack.c.l.b16 %v21
  %v69 = vunpack.c.l.b16 %v22
  %v70 = vunpack.c.l.b16 %v23
  %v71 = vunpack.c.l.b16 %v24
  %v72 = vunpack.c.l.b16 %v25
  %v73 = vunpack.c.l.b16 %v26
  %v74 = vunpack.c.l.b16 %v27
  %v75 = vunpack.c.l.b16 %v28
  %v76 = vunpack.c.l.b16 %v29
  %v77 = vunpack.c.l.b16 %v30
  %v78 = vunpack.c.l.b16 %v31
  %v79 = vunpack.c.l.b16 %v32
  %v80 = vunpack.c.l.b16 %v33
  %v81 = vunpack.c.l.b16 %v34
  %v82 = vunpack.c.l.b16 %v35
  %v83 = vpack.c.b16 %v65, %v64
  %v84 = vpack.c.b16 %v67, %v66
  %v85 = vpack.c.b16 %v69, %v68
  %v86 = vpack.c.b16 %v71, %v70
  %v87 = vpack.c.b16 %v73, %v72
  %v88 = vpack.c.b16 %v75, %v74
  %v89 = vpack.c.b16 %v77, %v76
  %v90 = vpack.c.b16 %v79, %v78
  %v91 = vpack.c.b16 %v81, %v80
  %v92 = vpack.c.b16 %v82, %v82
  %vm102 = vcmask 195584
  %v104 = vsel %vm102, %v43, 0
  %vm106 = vcmask 1043456
  %v108 = vsel %vm106, %v92, 0
  %110 = vmatprep.subr.bf16.mxu0 0
  %111 = vmatpush1.bf16.msra.mxu0 %v90
  %112 = vmatprep.subr.bf16.mxu0 0
  %113 = vmatpush1.bf16.msra.mxu0 %v89
  %114 = vmatprep.subr.bf16.mxu0 0
  %115 = vmatpush1.bf16.msra.mxu0 %v88
  %116 = vmatprep.subr.bf16.mxu0 0
  %117 = vmatpush1.bf16.msra.mxu0 %v87
  %118 = vmatprep.subr.bf16.mxu0 0
  %119 = vmatpush1.bf16.msra.mxu0 %v86
  %120 = vmatprep.subr.bf16.mxu0 0
  %121 = vmatpush1.bf16.msra.mxu0 %v85
  %122 = vmatprep.subr.bf16.mxu0 0
  %123 = vmatpush1.bf16.msra.mxu0 %v84
  %124 = vmatprep.subr.bf16.mxu0 0
  %125 = vmatpush1.bf16.msra.mxu0 %v83
  %126 = vmatprep.subr.bf16.mxu0 0
  %127 = vmatpush2.bf16.msra.mxu0 0
  %128 = vmatprep.subr.bf16.mxu0 0
  %129 = vmatpush2.bf16.msra.mxu0 0
  %130 = vmatprep.subr.bf16.mxu0 0
  %131 = vmatpush2.bf16.msra.mxu0 0
  %132 = vmatprep.subr.bf16.mxu0 0
  %133 = vmatpush2.bf16.msra.mxu0 0
  %134 = vmatprep.subr.bf16.mxu0 0
  %135 = vmatpush2.bf16.msra.mxu0 0
  %136 = vmatprep.subr.bf16.mxu0 0
  %137 = vmatpush2.bf16.msra.mxu0 0
  %138 = vmatprep.subr.bf16.mxu0 0
  %139 = vmatpush2.bf16.msra.mxu0 %v108
  %140 = vmatprep.subr.bf16.mxu0 0
  %141 = vmatpush2.bf16.msra.mxu0 %v91
  %142 = vmatprep.mubr.bf16.mxu0 %v104
  %143 = vmatmul.mubr.bf16.gmra.mxu0 %v42
  %v144 = vpop.f32.mrf.mxu0
  %v145 = vadd.f32 0.0, %v144
  %v146 = vpop.f32.mrf.mxu0
  %v147 = vpop.f32.mrf.mxu0
  %v148 = vadd.f32 0.0, %v147
  %v149 = vpop.f32.mrf.mxu0
  %150 = vdwg.mxu0
  %s151 = scalar_lea.vmem %s0, 76
  %v152 = vld [vmem:[%s151] sm:$0xf]
  %v153 = vld [vmem:[%s151 + $0x4] sm:$0xf]
  %v154 = vld [vmem:[%s151 + $0x8] sm:$0xf]
  %v155 = vld [vmem:[%s151 + $0xc] sm:$0xf]
  %v156 = vld [vmem:[%s151 + $0x10] sm:$0xf]
  %v157 = vld [vmem:[%s151 + $0x14] sm:$0xf]
  %v158 = vld [vmem:[%s151 + $0x18] sm:$0xf]
  %v159 = vld [vmem:[%s151 + $0x1c] sm:$0xf]
  %v160 = vld [vmem:[%s151 + $0x20] sm:$0xf]
  %v161 = vld [vmem:[%s151 + $0x24] sm:$0xf]
  %v162 = vld [vmem:[%s151 + $0x28] sm:$0xf]
  %v163 = vld [vmem:[%s151 + $0x2c] sm:$0xf]
  %v164 = vld [vmem:[%s151 + $0x30] sm:$0xf]
  %v165 = vld [vmem:[%s151 + $0x34] sm:$0xf]
  %v166 = vld [vmem:[%s151 + $0x38] sm:$0xf]
  %v167 = vld [vmem:[%s151 + $0x3c] sm:$0xf]
  %v168 = vld [vmem:[%s151 + $0x40] sm:$0xf]
  %v169 = vld [vmem:[%s151 + $0x44] sm:$0xf]
  %v170 = vld [vmem:[%s151 + $0x48] sm:$0xf]
  %v190 = vunpack.c.l.b16 %v152
  %v191 = vunpack.c.l.b16 %v153
  %v192 = vunpack.c.l.b16 %v154
  %v193 = vunpack.c.l.b16 %v155
  %v194 = vunpack.c.l.b16 %v156
  %v195 = vunpack.c.l.b16 %v157
  %v196 = vunpack.c.l.b16 %v158
  %v197 = vunpack.c.l.b16 %v159
  %v198 = vunpack.c.l.b16 %v160
  %v199 = vunpack.c.l.b16 %v161
  %v200 = vunpack.c.l.b16 %v162
  %v201 = vunpack.c.l.b16 %v163
  %v202 = vunpack.c.l.b16 %v164
  %v203 = vunpack.c.l.b16 %v165
  %v204 = vunpack.c.l.b16 %v166
  %v205 = vunpack.c.l.b16 %v167
  %v206 = vunpack.c.l.b16 %v168
  %v207 = vunpack.c.l.b16 %v169
  %v208 = vunpack.c.l.b16 %v170
  %v209 = vpack.c.b16 %v191, %v190
  %v210 = vpack.c.b16 %v193, %v192
  %v211 = vpack.c.b16 %v195, %v194
  %v212 = vpack.c.b16 %v197, %v196
  %v213 = vpack.c.b16 %v199, %v198
  %v214 = vpack.c.b16 %v201, %v200
  %v215 = vpack.c.b16 %v203, %v202
  %v216 = vpack.c.b16 %v205, %v204
  %v217 = vpack.c.b16 %v207, %v206
  %v218 = vpack.c.b16 %v208, %v208
  %v229 = vsel %vm106, %v218, 0
  %231 = vmatprep.subr.bf16.mxu0 0
  %232 = vmatpush1.bf16.msra.mxu0 %v216
  %233 = vmatprep.subr.bf16.mxu0 0
  %234 = vmatpush1.bf16.msra.mxu0 %v215
  %235 = vmatprep.subr.bf16.mxu0 0
  %236 = vmatpush1.bf16.msra.mxu0 %v214
  %237 = vmatprep.subr.bf16.mxu0 0
  %238 = vmatpush1.bf16.msra.mxu0 %v213
  %239 = vmatprep.subr.bf16.mxu0 0
  %240 = vmatpush1.bf16.msra.mxu0 %v212
  %241 = vmatprep.subr.bf16.mxu0 0
  %242 = vmatpush1.bf16.msra.mxu0 %v211
  %243 = vmatprep.subr.bf16.mxu0 0
  %244 = vmatpush1.bf16.msra.mxu0 %v210
  %245 = vmatprep.subr.bf16.mxu0 0
  %246 = vmatpush1.bf16.msra.mxu0 %v209
  %247 = vmatprep.subr.bf16.mxu0 0
  %248 = vmatpush2.bf16.msra.mxu0 0
  %249 = vmatprep.subr.bf16.mxu0 0
  %250 = vmatpush2.bf16.msra.mxu0 0
  %251 = vmatprep.subr.bf16.mxu0 0
  %252 = vmatpush2.bf16.msra.mxu0 0
  %253 = vmatprep.subr.bf16.mxu0 0
  %254 = vmatpush2.bf16.msra.mxu0 0
  %255 = vmatprep.subr.bf16.mxu0 0
  %256 = vmatpush2.bf16.msra.mxu0 0
  %257 = vmatprep.subr.bf16.mxu0 0
  %258 = vmatpush2.bf16.msra.mxu0 0
  %259 = vmatprep.subr.bf16.mxu0 0
  %260 = vmatpush2.bf16.msra.mxu0 %v229
  %261 = vmatprep.subr.bf16.mxu0 0
  %262 = vmatpush2.bf16.msra.mxu0 %v217
  %263 = vmatprep.mubr.bf16.mxu0 %v104
  %264 = vmatmul.mubr.bf16.gmra.mxu0 %v42
  %v265 = vpop.f32.mrf.mxu0
  %v266 = vadd.f32 0.0, %v265
  %v267 = vpop.f32.mrf.mxu0
  %v268 = vpop.f32.mrf.mxu0
  %v269 = vadd.f32 0.0, %v268
  %v270 = vpop.f32.mrf.mxu0
  %271 = vdwg.mxu0
  %s272 = scalar_lea.vmem %s0, 152
  %v273 = vld [vmem:[%s272] sm:$0xf]
  %v274 = vld [vmem:[%s272 + $0x4] sm:$0xf]
  %v275 = vld [vmem:[%s272 + $0x8] sm:$0xf]
  %v276 = vld [vmem:[%s272 + $0xc] sm:$0xf]
  %v277 = vld [vmem:[%s272 + $0x10] sm:$0xf]
  %v278 = vld [vmem:[%s272 + $0x14] sm:$0xf]
  %v279 = vld [vmem:[%s272 + $0x18] sm:$0xf]
  %v280 = vld [vmem:[%s272 + $0x1c] sm:$0xf]
  %v281 = vld [vmem:[%s272 + $0x20] sm:$0xf]
  %v282 = vld [vmem:[%s272 + $0x24] sm:$0xf]
  %v283 = vld [vmem:[%s272 + $0x28] sm:$0xf]
  %v284 = vld [vmem:[%s272 + $0x2c] sm:$0xf]
  %v285 = vld [vmem:[%s272 + $0x30] sm:$0xf]
  %v286 = vld [vmem:[%s272 + $0x34] sm:$0xf]
  %v287 = vld [vmem:[%s272 + $0x38] sm:$0xf]
  %v288 = vld [vmem:[%s272 + $0x3c] sm:$0xf]
  %v289 = vld [vmem:[%s272 + $0x40] sm:$0xf]
  %v290 = vld [vmem:[%s272 + $0x44] sm:$0xf]
  %v291 = vld [vmem:[%s272 + $0x48] sm:$0xf]
  %v311 = vunpack.c.l.b16 %v273
  %v312 = vunpack.c.l.b16 %v274
  %v313 = vunpack.c.l.b16 %v275
  %v314 = vunpack.c.l.b16 %v276
  %v315 = vunpack.c.l.b16 %v277
  %v316 = vunpack.c.l.b16 %v278
  %v317 = vunpack.c.l.b16 %v279
  %v318 = vunpack.c.l.b16 %v280
  %v319 = vunpack.c.l.b16 %v281
  %v320 = vunpack.c.l.b16 %v282
  %v321 = vunpack.c.l.b16 %v283
  %v322 = vunpack.c.l.b16 %v284
  %v323 = vunpack.c.l.b16 %v285
  %v324 = vunpack.c.l.b16 %v286
  %v325 = vunpack.c.l.b16 %v287
  %v326 = vunpack.c.l.b16 %v288
  %v327 = vunpack.c.l.b16 %v289
  %v328 = vunpack.c.l.b16 %v290
  %v329 = vunpack.c.l.b16 %v291
  %v330 = vpack.c.b16 %v312, %v311
  %v331 = vpack.c.b16 %v314, %v313
  %v332 = vpack.c.b16 %v316, %v315
  %v333 = vpack.c.b16 %v318, %v317
  %v334 = vpack.c.b16 %v320, %v319
  %v335 = vpack.c.b16 %v322, %v321
  %v336 = vpack.c.b16 %v324, %v323
  %v337 = vpack.c.b16 %v326, %v325
  %v338 = vpack.c.b16 %v328, %v327
  %v339 = vpack.c.b16 %v329, %v329
  %v350 = vsel %vm106, %v339, 0
  %352 = vmatprep.subr.bf16.mxu0 0
  %353 = vmatpush1.bf16.msra.mxu0 %v337
  %354 = vmatprep.subr.bf16.mxu0 0
  %355 = vmatpush1.bf16.msra.mxu0 %v336
  %356 = vmatprep.subr.bf16.mxu0 0
  %357 = vmatpush1.bf16.msra.mxu0 %v335
  %358 = vmatprep.subr.bf16.mxu0 0
  %359 = vmatpush1.bf16.msra.mxu0 %v334
  %360 = vmatprep.subr.bf16.mxu0 0
  %361 = vmatpush1.bf16.msra.mxu0 %v333
  %362 = vmatprep.subr.bf16.mxu0 0
  %363 = vmatpush1.bf16.msra.mxu0 %v332
  %364 = vmatprep.subr.bf16.mxu0 0
  %365 = vmatpush1.bf16.msra.mxu0 %v331
  %366 = vmatprep.subr.bf16.mxu0 0
  %367 = vmatpush1.bf16.msra.mxu0 %v330
  %368 = vmatprep.subr.bf16.mxu0 0
  %369 = vmatpush2.bf16.msra.mxu0 0
  %370 = vmatprep.subr.bf16.mxu0 0
  %371 = vmatpush2.bf16.msra.mxu0 0
  %372 = vmatprep.subr.bf16.mxu0 0
  %373 = vmatpush2.bf16.msra.mxu0 0
  %374 = vmatprep.subr.bf16.mxu0 0
  %375 = vmatpush2.bf16.msra.mxu0 0
  %376 = vmatprep.subr.bf16.mxu0 0
  %377 = vmatpush2.bf16.msra.mxu0 0
  %378 = vmatprep.subr.bf16.mxu0 0
  %379 = vmatpush2.bf16.msra.mxu0 0
  %380 = vmatprep.subr.bf16.mxu0 0
  %381 = vmatpush2.bf16.msra.mxu0 %v350
  %382 = vmatprep.subr.bf16.mxu0 0
  %383 = vmatpush2.bf16.msra.mxu0 %v338
  %384 = vmatprep.mubr.bf16.mxu0 %v104
  %385 = vmatmul.mubr.bf16.gmra.mxu0 %v42
  %v386 = vpop.f32.mrf.mxu0
  %v387 = vadd.f32 0.0, %v386
  %v388 = vpop.f32.mrf.mxu0
  %v389 = vpop.f32.mrf.mxu0
  %v390 = vadd.f32 0.0, %v389
  %v391 = vpop.f32.mrf.mxu0
  %392 = vdwg.mxu0
  %s393 = scalar_lea.vmem %s0, 228
  %v394 = vld [vmem:[%s393] sm:$0xf]
  %v395 = vld [vmem:[%s393 + $0x4] sm:$0xf]
  %v396 = vld [vmem:[%s393 + $0x8] sm:$0xf]
  %v397 = vld [vmem:[%s393 + $0xc] sm:$0xf]
  %v398 = vld [vmem:[%s393 + $0x10] sm:$0xf]
  %v399 = vld [vmem:[%s393 + $0x14] sm:$0xf]
  %v400 = vld [vmem:[%s393 + $0x18] sm:$0xf]
  %v401 = vld [vmem:[%s393 + $0x1c] sm:$0xf]
  %v402 = vld [vmem:[%s393 + $0x20] sm:$0xf]
  %v403 = vld [vmem:[%s393 + $0x24] sm:$0xf]
  %v404 = vld [vmem:[%s393 + $0x28] sm:$0xf]
  %v405 = vld [vmem:[%s393 + $0x2c] sm:$0xf]
  %v406 = vld [vmem:[%s393 + $0x30] sm:$0xf]
  %v407 = vld [vmem:[%s393 + $0x34] sm:$0xf]
  %v408 = vld [vmem:[%s393 + $0x38] sm:$0xf]
  %v409 = vld [vmem:[%s393 + $0x3c] sm:$0xf]
  %v410 = vld [vmem:[%s393 + $0x40] sm:$0xf]
  %v411 = vld [vmem:[%s393 + $0x44] sm:$0xf]
  %v412 = vld [vmem:[%s393 + $0x48] sm:$0xf]
  %v432 = vunpack.c.l.b16 %v394
  %v433 = vunpack.c.l.b16 %v395
  %v434 = vunpack.c.l.b16 %v396
  %v435 = vunpack.c.l.b16 %v397
  %v436 = vunpack.c.l.b16 %v398
  %v437 = vunpack.c.l.b16 %v399
  %v438 = vunpack.c.l.b16 %v400
  %v439 = vunpack.c.l.b16 %v401
  %v440 = vunpack.c.l.b16 %v402
  %v441 = vunpack.c.l.b16 %v403
  %v442 = vunpack.c.l.b16 %v404
  %v443 = vunpack.c.l.b16 %v405
  %v444 = vunpack.c.l.b16 %v406
  %v445 = vunpack.c.l.b16 %v407
  %v446 = vunpack.c.l.b16 %v408
  %v447 = vunpack.c.l.b16 %v409
  %v448 = vunpack.c.l.b16 %v410
  %v449 = vunpack.c.l.b16 %v411
  %v450 = vunpack.c.l.b16 %v412
  %v451 = vpack.c.b16 %v433, %v432
  %v452 = vpack.c.b16 %v435, %v434
  %v453 = vpack.c.b16 %v437, %v436
  %v454 = vpack.c.b16 %v439, %v438
  %v455 = vpack.c.b16 %v441, %v440
  %v456 = vpack.c.b16 %v443, %v442
  %v457 = vpack.c.b16 %v445, %v444
  %v458 = vpack.c.b16 %v447, %v446
  %v459 = vpack.c.b16 %v449, %v448
  %v460 = vpack.c.b16 %v450, %v450
  %v471 = vsel %vm106, %v460, 0
  %473 = vmatprep.subr.bf16.mxu0 0
  %474 = vmatpush1.bf16.msra.mxu0 %v458
  %475 = vmatprep.subr.bf16.mxu0 0
  %476 = vmatpush1.bf16.msra.mxu0 %v457
  %477 = vmatprep.subr.bf16.mxu0 0
  %478 = vmatpush1.bf16.msra.mxu0 %v456
  %479 = vmatprep.subr.bf16.mxu0 0
  %480 = vmatpush1.bf16.msra.mxu0 %v455
  %481 = vmatprep.subr.bf16.mxu0 0
  %482 = vmatpush1.bf16.msra.mxu0 %v454
  %483 = vmatprep.subr.bf16.mxu0 0
  %484 = vmatpush1.bf16.msra.mxu0 %v453
  %485 = vmatprep.subr.bf16.mxu0 0
  %486 = vmatpush1.bf16.msra.mxu0 %v452
  %487 = vmatprep.subr.bf16.mxu0 0
  %488 = vmatpush1.bf16.msra.mxu0 %v451
  %489 = vmatprep.subr.bf16.mxu0 0
  %490 = vmatpush2.bf16.msra.mxu0 0
  %491 = vmatprep.subr.bf16.mxu0 0
  %492 = vmatpush2.bf16.msra.mxu0 0
  %493 = vmatprep.subr.bf16.mxu0 0
  %494 = vmatpush2.bf16.msra.mxu0 0
  %495 = vmatprep.subr.bf16.mxu0 0
  %496 = vmatpush2.bf16.msra.mxu0 0
  %497 = vmatprep.subr.bf16.mxu0 0
  %498 = vmatpush2.bf16.msra.mxu0 0
  %499 = vmatprep.subr.bf16.mxu0 0
  %500 = vmatpush2.bf16.msra.mxu0 0
  %501 = vmatprep.subr.bf16.mxu0 0
  %502 = vmatpush2.bf16.msra.mxu0 %v471
  %503 = vmatprep.subr.bf16.mxu0 0
  %504 = vmatpush2.bf16.msra.mxu0 %v459
  %505 = vmatprep.mubr.bf16.mxu0 %v104
  %506 = vmatmul.mubr.bf16.gmra.mxu0 %v42
  %v507 = vpop.f32.mrf.mxu0
  %v508 = vadd.f32 0.0, %v507
  %v509 = vpop.f32.mrf.mxu0
  %v510 = vpop.f32.mrf.mxu0
  %v511 = vadd.f32 0.0, %v510
  %v512 = vpop.f32.mrf.mxu0
  %513 = vdwg.mxu0
  %v514 = vmax.f32 %v145, %v266
  %v515 = vmax.f32 %v148, %v269
  %v516 = vmax.f32 %v387, %v508
  %v517 = vmax.f32 %v390, %v511
  %v518 = vmax.f32 %v514, %v516
  %v519 = vmax.f32 %v515, %v517
  %v520 = vld [vmem:[%s2] sm:$0xff]
  %v521 = vld [vmem:[%s2 + $0x8] sm:$0xff]
  %523 = vset.pattern.permute.xlu0 0
  %524 = vperm.xlu0 %523, %v520
  %v525 = vpop.permute.xlu0 %524
  %528 = vset.pattern.permute.xlu0 0
  %529 = vperm.xlu0 %528, %v521
  %v530 = vpop.permute.xlu0 %529
  %v532 = vadd.f32 %v518, %v525
  %v533 = vadd.f32 %v519, %v530
  %v534 = vmax.f32 %v532, 0.0
  %v535 = vmax.f32 %v533, 0.0
  %536 = vst [vmem:[%s3] sm:$0xff] %v534
  %537 = vst [vmem:[%s3 + $0x8] sm:$0xff] %v535
  // Predicated region
  $region14: #{net_forward.4} parent=0 // pred_check
    _
  $region15: #{net_forward.4} parent=0 // pred_check_branch
    %539 = sbr.rel (0) target = $region17
  $region16: #{net_forward.4} parent=0 // pred_region
    _
  $region17: #{net_forward.4} parent=0 // pred_fallthru
    _
  // Predicated region
  $region18: #{net_forward.4} parent=0 // pred_check
    _
  $region19: #{net_forward.4} parent=0 // pred_check_branch
    %541 = sbr.rel (0) target = $region21
  $region20: #{net_forward.4} parent=0 // pred_region
    _
  $region21: #{net_forward.4} parent=0 // pred_fallthru
    _

// kernel: net_forward.5
$region0: #{net_forward.5}
  #allocation0 [shape = 'u32[]', space=smem, size = 0x4, offset = 0x4, fixed_abs, tag = 'smem constant byte address 0x4 - core index']
  #allocation1 [shape = 'u32[144,128]{1,0:T(1,128)}', space=vmem, size = 0x12000, scoped, tag = 'internal scratch']
  %s0 = inlined_call_operand.vmem [shape: bf16[8,512], index: 0, kind: input, shape index: {}]
  %s1 = inlined_call_operand.vmem [shape: bf16[512,128], index: 1, kind: input, shape index: {}]
  %s2 = inlined_call_operand.vmem [shape: f32[1,128], index: 2, kind: input, shape index: {}]
  %s3 = inlined_call_operand.vmem [shape: bf16[128,128], index: 3, kind: input, shape index: {}]
  %s4 = inlined_call_operand.vmem [shape: f32[1,128], index: 4, kind: input, shape index: {}]
  %s5 = inlined_call_operand.vmem [shape: bf16[128,128], index: 5, kind: input, shape index: {}]
  %s6 = inlined_call_operand.vmem [shape: f32[1,128], index: 6, kind: input, shape index: {}]
  %s7 = inlined_call_operand.vmem [shape: f32[8,128], index: 7, kind: output, shape index: {}]
  %s8 = sld [smem:[#allocation0]]
  $region38: #{net_forward.5} parent=0
    _
  %s10 = ssub.s32 1, %s8
  %s11 = scalar_select 0, %s10, %s8
  // Predicated region
  $region2: #{net_forward.5} parent=0 // pred_check
    _
  $region3: #{net_forward.5} parent=0 // pred_check_branch
    %13 = sbr.rel (0) target = $region5
  $region4: #{net_forward.5} parent=0 // pred_region
    _
  $region5: #{net_forward.5} parent=0 // pred_fallthru
    _
  // Predicated region
  $region6: #{net_forward.5} parent=0 // pred_check
    _
  $region7: #{net_forward.5} parent=0 // pred_check_branch
    %15 = sbr.rel (0) target = $region9
  $region8: #{net_forward.5} parent=0 // pred_region
    _
  $region9: #{net_forward.5} parent=0 // pred_fallthru
    _
  // Predicated region
  $region10: #{net_forward.5} parent=0 // pred_check
    _
  $region11: #{net_forward.5} parent=0 // pred_check_branch
    %17 = sbr.rel (0) target = $region13
  $region12: #{net_forward.5} parent=0 // pred_region
    _
  $region13: #{net_forward.5} parent=0 // pred_fallthru
    _
  // Predicated region
  $region14: #{net_forward.5} parent=0 // pred_check
    _
  $region15: #{net_forward.5} parent=0 // pred_check_branch
    %19 = sbr.rel (0) target = $region17
  $region16: #{net_forward.5} parent=0 // pred_region
    _
  $region17: #{net_forward.5} parent=0 // pred_fallthru
    _
  // Predicated region
  $region18: #{net_forward.5} parent=0 // pred_check
    _
  $region19: #{net_forward.5} parent=0 // pred_check_branch
    %21 = sbr.rel (0) target = $region21
  $region20: #{net_forward.5} parent=0 // pred_region
    _
  $region21: #{net_forward.5} parent=0 // pred_fallthru
    _
  // Predicated region
  $region22: #{net_forward.5} parent=0 // pred_check
    _
  $region23: #{net_forward.5} parent=0 // pred_check_branch
    %23 = sbr.rel (0) target = $region25
  $region24: #{net_forward.5} parent=0 // pred_region
    _
  $region25: #{net_forward.5} parent=0 // pred_fallthru
    _
  // Predicated region
  $region26: #{net_forward.5} parent=0 // pred_check
    _
  $region27: #{net_forward.5} parent=0 // pred_check_branch
    %25 = sbr.rel (0) target = $region29
  $region28: #{net_forward.5} parent=0 // pred_region
    _
  $region29: #{net_forward.5} parent=0 // pred_fallthru
    _
  %v27 = vld [vmem:[%s0] sm:$0xff]
  %v28 = vld [vmem:[%s0 + $0x8] sm:$0xff]
  %v29 = vld [vmem:[%s1] sm:$0xf]
  %v30 = vld [vmem:[%s1 + $0x4] sm:$0xf]
  %v31 = vld [vmem:[%s1 + $0x8] sm:$0xf]
  %v32 = vld [vmem:[%s1 + $0xc] sm:$0xf]
  %v33 = vld [vmem:[%s1 + $0x10] sm:$0xf]
  %v34 = vld [vmem:[%s1 + $0x14] sm:$0xf]
  %v35 = vld [vmem:[%s1 + $0x18] sm:$0xf]
  %v36 = vld [vmem:[%s1 + $0x1c] sm:$0xf]
  %v37 = vld [vmem:[%s1 + $0x20] sm:$0xf]
  %v38 = vld [vmem:[%s1 + $0x24] sm:$0xf]
  %v39 = vld [vmem:[%s1 + $0x28] sm:$0xf]
  %v40 = vld [vmem:[%s1 + $0x2c] sm:$0xf]
  %v41 = vld [vmem:[%s1 + $0x30] sm:$0xf]
  %v42 = vld [vmem:[%s1 + $0x34] sm:$0xf]
  %v43 = vld [vmem:[%s1 + $0x38] sm:$0xf]
  %v44 = vld [vmem:[%s1 + $0x3c] sm:$0xf]
  %v45 = vld [vmem:[%s1 + $0x40] sm:$0xf]
  %v46 = vld [vmem:[%s1 + $0x44] sm:$0xf]
  %v47 = vld [vmem:[%s1 + $0x48] sm:$0xf]
  %v48 = vld [vmem:[%s1 + $0x4c] sm:$0xf]
  %v49 = vld [vmem:[%s1 + $0x50] sm:$0xf]
  %v50 = vld [vmem:[%s1 + $0x54] sm:$0xf]
  %v51 = vld [vmem:[%s1 + $0x58] sm:$0xf]
  %v52 = vld [vmem:[%s1 + $0x5c] sm:$0xf]
  %v53 = vld [vmem:[%s1 + $0x60] sm:$0xf]
  %v54 = vld [vmem:[%s1 + $0x64] sm:$0xf]
  %v55 = vld [vmem:[%s1 + $0x68] sm:$0xf]
  %v56 = vld [vmem:[%s1 + $0x6c] sm:$0xf]
  %v57 = vld [vmem:[%s1 + $0x70] sm:$0xf]
  %v58 = vld [vmem:[%s1 + $0x74] sm:$0xf]
  %v59 = vld [vmem:[%s1 + $0x78] sm:$0xf]
  %v60 = vld [vmem:[%s1 + $0x7c] sm:$0xf]
  %v61 = vld [vmem:[%s1 + $0x80] sm:$0xf]
  %v62 = vld [vmem:[%s1 + $0x84] sm:$0xf]
  %v63 = vld [vmem:[%s1 + $0x88] sm:$0xf]
  %v64 = vld [vmem:[%s1 + $0x8c] sm:$0xf]
  %v65 = vld [vmem:[%s1 + $0x90] sm:$0xf]
  %v66 = vld [vmem:[%s1 + $0x94] sm:$0xf]
  %v67 = vld [vmem:[%s1 + $0x98] sm:$0xf]
  %v68 = vld [vmem:[%s1 + $0x9c] sm:$0xf]
  %v69 = vld [vmem:[%s1 + $0xa0] sm:$0xf]
  %v70 = vld [vmem:[%s1 + $0xa4] sm:$0xf]
  %v71 = vld [vmem:[%s1 + $0xa8] sm:$0xf]
  %v72 = vld [vmem:[%s1 + $0xac] sm:$0xf]
  %v73 = vld [vmem:[%s1 + $0xb0] sm:$0xf]
  %v74 = vld [vmem:[%s1 + $0xb4] sm:$0xf]
  %v75 = vld [vmem:[%s1 + $0xb8] sm:$0xf]
  %v76 = vld [vmem:[%s1 + $0xbc] sm:$0xf]
  %v77 = vld [vmem:[%s1 + $0xc0] sm:$0xf]
  %v78 = vld [vmem:[%s1 + $0xc4] sm:$0xf]
  %v79 = vld [vmem:[%s1 + $0xc8] sm:$0xf]
  %v80 = vld [vmem:[%s1 + $0xcc] sm:$0xf]
  %v81 = vld [vmem:[%s1 + $0xd0] sm:$0xf]
  %v82 = vld [vmem:[%s1 + $0xd4] sm:$0xf]
  %v83 = vld [vmem:[%s1 + $0xd8] sm:$0xf]
  %v84 = vld [vmem:[%s1 + $0xdc] sm:$0xf]
  %v85 = vld [vmem:[%s1 + $0xe0] sm:$0xf]
  %v86 = vld [vmem:[%s1 + $0xe4] sm:$0xf]
  %v87 = vld [vmem:[%s1 + $0xe8] sm:$0xf]
  %v88 = vld [vmem:[%s1 + $0xec] sm:$0xf]
  %v89 = vld [vmem:[%s1 + $0xf0] sm:$0xf]
  %v90 = vld [vmem:[%s1 + $0xf4] sm:$0xf]
  %v91 = vld [vmem:[%s1 + $0xf8] sm:$0xf]
  %v92 = vld [vmem:[%s1 + $0xfc] sm:$0xf]
  %v93 = vld [vmem:[%s2] sm:$0x1]
  %v95 = vlaneseq
  %v96 = vshrl.u32 %v95, 7
  %v97 = vsub.s32 0, %v96
  %v98 = vrot.slane %v93, %v97
  %v102 = vunpack.c.l.b16 %v27
  %v103 = vunpack.c.h.b16 %v27
  %v104 = vunpack.c.l.b16 %v28
  %v105 = vunpack.c.h.b16 %v28
  %v106 = vpack.c.b16 %v102, %v102
  %v107 = vpack.c.b16 %v103, %v103
  %v108 = vpack.c.b16 %v104, %v104
  %v109 = vpack.c.b16 %v105, %v105
  %v178 = vunpack.c.l.b16 %v29
  %v179 = vunpack.c.l.b16 %v30
  %v180 = vunpack.c.l.b16 %v31
  %v181 = vunpack.c.l.b16 %v32
  %v182 = vunpack.c.l.b16 %v33
  %v183 = vunpack.c.l.b16 %v34
  %v184 = vunpack.c.l.b16 %v35
  %v185 = vunpack.c.l.b16 %v36
  %v186 = vunpack.c.l.b16 %v37
  %v187 = vunpack.c.l.b16 %v38
  %v188 = vunpack.c.l.b16 %v39
  %v189 = vunpack.c.l.b16 %v40
  %v190 = vunpack.c.l.b16 %v41
  %v191 = vunpack.c.l.b16 %v42
  %v192 = vunpack.c.l.b16 %v43
  %v193 = vunpack.c.l.b16 %v44
  %v194 = vunpack.c.l.b16 %v45
  %v195 = vunpack.c.l.b16 %v46
  %v196 = vunpack.c.l.b16 %v47
  %v197 = vunpack.c.l.b16 %v48
  %v198 = vunpack.c.l.b16 %v49
  %v199 = vunpack.c.l.b16 %v50
  %v200 = vunpack.c.l.b16 %v51
  %v201 = vunpack.c.l.b16 %v52
  %v202 = vunpack.c.l.b16 %v53
  %v203 = vunpack.c.l.b16 %v54
  %v204 = vunpack.c.l.b16 %v55
  %v205 = vunpack.c.l.b16 %v56
  %v206 = vunpack.c.l.b16 %v57
  %v207 = vunpack.c.l.b16 %v58
  %v208 = vunpack.c.l.b16 %v59
  %v209 = vunpack.c.l.b16 %v60
  %v210 = vunpack.c.l.b16 %v61
  %v211 = vunpack.c.l.b16 %v62
  %v212 = vunpack.c.l.b16 %v63
  %v213 = vunpack.c.l.b16 %v64
  %v214 = vunpack.c.l.b16 %v65
  %v215 = vunpack.c.l.b16 %v66
  %v216 = vunpack.c.l.b16 %v67
  %v217 = vunpack.c.l.b16 %v68
  %v218 = vunpack.c.l.b16 %v69
  %v219 = vunpack.c.l.b16 %v70
  %v220 = vunpack.c.l.b16 %v71
  %v221 = vunpack.c.l.b16 %v72
  %v222 = vunpack.c.l.b16 %v73
  %v223 = vunpack.c.l.b16 %v74
  %v224 = vunpack.c.l.b16 %v75
  %v225 = vunpack.c.l.b16 %v76
  %v226 = vunpack.c.l.b16 %v77
  %v227 = vunpack.c.l.b16 %v78
  %v228 = vunpack.c.l.b16 %v79
  %v229 = vunpack.c.l.b16 %v80
  %v230 = vunpack.c.l.b16 %v81
  %v231 = vunpack.c.l.b16 %v82
  %v232 = vunpack.c.l.b16 %v83
  %v233 = vunpack.c.l.b16 %v84
  %v234 = vunpack.c.l.b16 %v85
  %v235 = vunpack.c.l.b16 %v86
  %v236 = vunpack.c.l.b16 %v87
  %v237 = vunpack.c.l.b16 %v88
  %v238 = vunpack.c.l.b16 %v89
  %v239 = vunpack.c.l.b16 %v90
  %v240 = vunpack.c.l.b16 %v91
  %v241 = vunpack.c.l.b16 %v92
  %v242 = vpack.c.b16 %v179, %v178
  %v243 = vpack.c.b16 %v181, %v180
  %v244 = vpack.c.b16 %v183, %v182
  %v245 = vpack.c.b16 %v185, %v184
  %v246 = vpack.c.b16 %v187, %v186
  %v247 = vpack.c.b16 %v189, %v188
  %v248 = vpack.c.b16 %v191, %v190
  %v249 = vpack.c.b16 %v193, %v192
  %v250 = vpack.c.b16 %v195, %v194
  %v251 = vpack.c.b16 %v197, %v196
  %v252 = vpack.c.b16 %v199, %v198
  %v253 = vpack.c.b16 %v201, %v200
  %v254 = vpack.c.b16 %v203, %v202
  %v255 = vpack.c.b16 %v205, %v204
  %v256 = vpack.c.b16 %v207, %v206
  %v257 = vpack.c.b16 %v209, %v208
  %v258 = vpack.c.b16 %v211, %v210
  %v259 = vpack.c.b16 %v213, %v212
  %v260 = vpack.c.b16 %v215, %v214
  %v261 = vpack.c.b16 %v217, %v216
  %v262 = vpack.c.b16 %v219, %v218
  %v263 = vpack.c.b16 %v221, %v220
  %v264 = vpack.c.b16 %v223, %v222
  %v265 = vpack.c.b16 %v225, %v224
  %v266 = vpack.c.b16 %v227, %v226
  %v267 = vpack.c.b16 %v229, %v228
  %v268 = vpack.c.b16 %v231, %v230
  %v269 = vpack.c.b16 %v233, %v232
  %v270 = vpack.c.b16 %v235, %v234
  %v271 = vpack.c.b16 %v237, %v236
  %v272 = vpack.c.b16 %v239, %v238
  %v273 = vpack.c.b16 %v241, %v240
  %306 = vmatprep.subr.bf16.mxu0 0
  %307 = vmatpush1.bf16.msra.mxu0 %v249
  %308 = vmatprep.subr.bf16.mxu0 0
  %309 = vmatpush1.bf16.msra.mxu0 %v248
  %310 = vmatprep.subr.bf16.mxu0 0
  %311 = vmatpush1.bf16.msra.mxu0 %v247
  %312 = vmatprep.subr.bf16.mxu0 0
  %313 = vmatpush1.bf16.msra.mxu0 %v246
  %314 = vmatprep.subr.bf16.mxu0 0
  %315 = vmatpush1.bf16.msra.mxu0 %v245
  %316 = vmatprep.subr.bf16.mxu0 0
  %317 = vmatpush1.bf16.msra.mxu0 %v244
  %318 = vmatprep.subr.bf16.mxu0 0
  %319 = vmatpush1.bf16.msra.mxu0 %v243
  %320 = vmatprep.subr.bf16.mxu0 0
  %321 = vmatpush1.bf16.msra.mxu0 %v242
  %322 = vmatprep.subr.bf16.mxu0 0
  %323 = vmatpush2.bf16.msra.mxu0 %v257
  %324 = vmatprep.subr.bf16.mxu0 0
  %325 = vmatpush2.bf16.msra.mxu0 %v256
  %326 = vmatprep.subr.bf16.mxu0 0
  %327 = vmatpush2.bf16.msra.mxu0 %v255
  %328 = vmatprep.subr.bf16.mxu0 0
  %329 = vmatpush2.bf16.msra.mxu0 %v254
  %330 = vmatprep.subr.bf16.mxu0 0
  %331 = vmatpush2.bf16.msra.mxu0 %v253
  %332 = vmatprep.subr.bf16.mxu0 0
  %333 = vmatpush2.bf16.msra.mxu0 %v252
  %334 = vmatprep.subr.bf16.mxu0 0
  %335 = vmatpush2.bf16.msra.mxu0 %v251
  %336 = vmatprep.subr.bf16.mxu0 0
  %337 = vmatpush2.bf16.msra.mxu0 %v250
  %338 = vmatprep.mubr.bf16.mxu0 %v107
  %339 = vmatmul.mubr.bf16.gmra.mxu0 %v106
  %v340 = vpop.f32.mrf.mxu0
  %v341 = vadd.f32 %v98, %v340
  %v342 = vpop.f32.mrf.mxu0
  %v343 = vpop.f32.mrf.mxu0
  %v344 = vpop.f32.mrf.mxu0
  %345 = vdwg.mxu0
  %346 = vmatprep.subr.bf16.mxu0 0
  %347 = vmatpush1.bf16.msra.mxu0 %v265
  %348 = vmatprep.subr.bf16.mxu0 0
  %349 = vmatpush1.bf16.msra.mxu0 %v264
  %350 = vmatprep.subr.bf16.mxu0 0
  %351 = vmatpush1.bf16.msra.mxu0 %v263
  %352 = vmatprep.subr.bf16.mxu0 0
  %353 = vmatpush1.bf16.msra.mxu0 %v262
  %354 = vmatprep.subr.bf16.mxu0 0
  %355 = vmatpush1.bf16.msra.mxu0 %v261
  %356 = vmatprep.subr.bf16.mxu0 0
  %357 = vmatpush1.bf16.msra.mxu0 %v260
  %358 = vmatprep.subr.bf16.mxu0 0
  %359 = vmatpush1.bf16.msra.mxu0 %v259
  %360 = vmatprep.subr.bf16.mxu0 0
  %361 = vmatpush1.bf16.msra.mxu0 %v258
  %362 = vmatprep.subr.bf16.mxu0 0
  %363 = vmatpush2.bf16.msra.mxu0 %v273
  %364 = vmatprep.subr.bf16.mxu0 0
  %365 = vmatpush2.bf16.msra.mxu0 %v272
  %366 = vmatprep.subr.bf16.mxu0 0
  %367 = vmatpush2.bf16.msra.mxu0 %v271
  %368 = vmatprep.subr.bf16.mxu0 0
  %369 = vmatpush2.bf16.msra.mxu0 %v270
  %370 = vmatprep.subr.bf16.mxu0 0
  %371 = vmatpush2.bf16.msra.mxu0 %v269
  %372 = vmatprep.subr.bf16.mxu0 0
  %373 = vmatpush2.bf16.msra.mxu0 %v268
  %374 = vmatprep.subr.bf16.mxu0 0
  %375 = vmatpush2.bf16.msra.mxu0 %v267
  %376 = vmatprep.subr.bf16.mxu0 0
  %377 = vmatpush2.bf16.msra.mxu0 %v266
  %378 = vmatprep.mubr.bf16.mxu0 %v109
  %379 = vmatmul.mubr.bf16.gmra.mxu0 %v108
  %v380 = vpop.f32.mrf.mxu0
  %v381 = vadd.f32 %v341, %v380
  %v382 = vpop.f32.mrf.mxu0
  %v383 = vpop.f32.mrf.mxu0
  %v384 = vpop.f32.mrf.mxu0
  %385 = vdwg.mxu0
  %v386 = vmax.f32 %v381, 0.0
  %v387 = vpack.c.bf16 %v386, %v386
  %v388 = vld [vmem:[%s3] sm:$0xf]
  %v389 = vld [vmem:[%s3 + $0x4] sm:$0xf]
  %v390 = vld [vmem:[%s3 + $0x8] sm:$0xf]
  %v391 = vld [vmem:[%s3 + $0xc] sm:$0xf]
  %v392 = vld [vmem:[%s3 + $0x10] sm:$0xf]
  %v393 = vld [vmem:[%s3 + $0x14] sm:$0xf]
  %v394 = vld [vmem:[%s3 + $0x18] sm:$0xf]
  %v395 = vld [vmem:[%s3 + $0x1c] sm:$0xf]
  %v396 = vld [vmem:[%s3 + $0x20] sm:$0xf]
  %v397 = vld [vmem:[%s3 + $0x24] sm:$0xf]
  %v398 = vld [vmem:[%s3 + $0x28] sm:$0xf]
  %v399 = vld [vmem:[%s3 + $0x2c] sm:$0xf]
  %v400 = vld [vmem:[%s3 + $0x30] sm:$0xf]
  %v401 = vld [vmem:[%s3 + $0x34] sm:$0xf]
  %v402 = vld [vmem:[%s3 + $0x38] sm:$0xf]
  %v403 = vld [vmem:[%s3 + $0x3c] sm:$0xf]
  %v404 = vld [vmem:[%s4] sm:$0x1]
  %v406 = vlaneseq
  %v407 = vshrl.u32 %v406, 7
  %v408 = vsub.s32 0, %v407
  %v409 = vrot.slane %v404, %v408
  %v427 = vunpack.c.l.b16 %v388
  %v428 = vunpack.c.l.b16 %v389
  %v429 = vunpack.c.l.b16 %v390
  %v430 = vunpack.c.l.b16 %v391
  %v431 = vunpack.c.l.b16 %v392
  %v432 = vunpack.c.l.b16 %v393
  %v433 = vunpack.c.l.b16 %v394
  %v434 = vunpack.c.l.b16 %v395
  %v435 = vunpack.c.l.b16 %v396
  %v436 = vunpack.c.l.b16 %v397
  %v437 = vunpack.c.l.b16 %v398
  %v438 = vunpack.c.l.b16 %v399
  %v439 = vunpack.c.l.b16 %v400
  %v440 = vunpack.c.l.b16 %v401
  %v441 = vunpack.c.l.b16 %v402
  %v442 = vunpack.c.l.b16 %v403
  %v443 = vpack.c.b16 %v428, %v427
  %v444 = vpack.c.b16 %v430, %v429
  %v445 = vpack.c.b16 %v432, %v431
  %v446 = vpack.c.b16 %v434, %v433
  %v447 = vpack.c.b16 %v436, %v435
  %v448 = vpack.c.b16 %v438, %v437
  %v449 = vpack.c.b16 %v440, %v439
  %v450 = vpack.c.b16 %v442, %v441
  %459 = vmatprep.subr.bf16.mxu0 0
  %460 = vmatpush1.bf16.msra.mxu0 %v450
  %461 = vmatprep.subr.bf16.mxu0 0
  %462 = vmatpush1.bf16.msra.mxu0 %v449
  %463 = vmatprep.subr.bf16.mxu0 0
  %464 = vmatpush1.bf16.msra.mxu0 %v448
  %465 = vmatprep.subr.bf16.mxu0 0
  %466 = vmatpush1.bf16.msra.mxu0 %v447
  %467 = vmatprep.subr.bf16.mxu0 0
  %468 = vmatpush1.bf16.msra.mxu0 %v446
  %469 = vmatprep.subr.bf16.mxu0 0
  %470 = vmatpush1.bf16.msra.mxu0 %v445
  %471 = vmatprep.subr.bf16.mxu0 0
  %472 = vmatpush1.bf16.msra.mxu0 %v444
  %473 = vmatprep.subr.bf16.mxu0 0
  %474 = vmatpush1.bf16.msra.mxu0 %v443
  %475 = vmatprep.subr.bf16.mxu0 0
  %476 = vmatpush2.bf16.msra.mxu0 0
  %477 = vmatprep.subr.bf16.mxu0 0
  %478 = vmatpush2.bf16.msra.mxu0 0
  %479 = vmatprep.subr.bf16.mxu0 0
  %480 = vmatpush2.bf16.msra.mxu0 0
  %481 = vmatprep.subr.bf16.mxu0 0
  %482 = vmatpush2.bf16.msra.mxu0 0
  %483 = vmatprep.subr.bf16.mxu0 0
  %484 = vmatpush2.bf16.msra.mxu0 0
  %485 = vmatprep.subr.bf16.mxu0 0
  %486 = vmatpush2.bf16.msra.mxu0 0
  %487 = vmatprep.subr.bf16.mxu0 0
  %488 = vmatpush2.bf16.msra.mxu0 0
  %489 = vmatprep.subr.bf16.mxu0 0
  %490 = vmatpush2.bf16.msra.mxu0 0
  %491 = vmatprep.mubr.bf16.mxu0 0
  %492 = vmatmul.mubr.bf16.gmra.mxu0 %v387
  %v493 = vpop.f32.mrf.mxu0
  %v494 = vadd.f32 %v409, %v493
  %v495 = vpop.f32.mrf.mxu0
  %v496 = vpop.f32.mrf.mxu0
  %v497 = vpop.f32.mrf.mxu0
  %498 = vdwg.mxu0
  %v499 = vmax.f32 %v494, 0.0
  %v500 = vpack.c.bf16 %v499, %v499
  %v501 = vld [vmem:[%s5] sm:$0xf]
  %v502 = vld [vmem:[%s5 + $0x4] sm:$0xf]
  %v503 = vld [vmem:[%s5 + $0x8] sm:$0xf]
  %v504 = vld [vmem:[%s5 + $0xc] sm:$0xf]
  %v505 = vld [vmem:[%s5 + $0x10] sm:$0xf]
  %v506 = vld [vmem:[%s5 + $0x14] sm:$0xf]
  %v507 = vld [vmem:[%s5 + $0x18] sm:$0xf]
  %v508 = vld [vmem:[%s5 + $0x1c] sm:$0xf]
  %v509 = vld [vmem:[%s5 + $0x20] sm:$0xf]
  %v510 = vld [vmem:[%s5 + $0x24] sm:$0xf]
  %v511 = vld [vmem:[%s5 + $0x28] sm:$0xf]
  %v512 = vld [vmem:[%s5 + $0x2c] sm:$0xf]
  %v513 = vld [vmem:[%s5 + $0x30] sm:$0xf]
  %v514 = vld [vmem:[%s5 + $0x34] sm:$0xf]
  %v515 = vld [vmem:[%s5 + $0x38] sm:$0xf]
  %v516 = vld [vmem:[%s5 + $0x3c] sm:$0xf]
  %v517 = vld [vmem:[%s6] sm:$0x1]
  %v519 = vlaneseq
  %v520 = vshrl.u32 %v519, 7
  %v521 = vsub.s32 0, %v520
  %v522 = vrot.slane %v517, %v521
  %v540 = vunpack.c.l.b16 %v501
  %v541 = vunpack.c.l.b16 %v502
  %v542 = vunpack.c.l.b16 %v503
  %v543 = vunpack.c.l.b16 %v504
  %v544 = vunpack.c.l.b16 %v505
  %v545 = vunpack.c.l.b16 %v506
  %v546 = vunpack.c.l.b16 %v507
  %v547 = vunpack.c.l.b16 %v508
  %v548 = vunpack.c.l.b16 %v509
  %v549 = vunpack.c.l.b16 %v510
  %v550 = vunpack.c.l.b16 %v511
  %v551 = vunpack.c.l.b16 %v512
  %v552 = vunpack.c.l.b16 %v513
  %v553 = vunpack.c.l.b16 %v514
  %v554 = vunpack.c.l.b16 %v515
  %v555 = vunpack.c.l.b16 %v516
  %v556 = vpack.c.b16 %v541, %v540
  %v557 = vpack.c.b16 %v543, %v542
  %v558 = vpack.c.b16 %v545, %v544
  %v559 = vpack.c.b16 %v547, %v546
  %v560 = vpack.c.b16 %v549, %v548
  %v561 = vpack.c.b16 %v551, %v550
  %v562 = vpack.c.b16 %v553, %v552
  %v563 = vpack.c.b16 %v555, %v554
  %572 = vmatprep.subr.bf16.mxu0 0
  %573 = vmatpush1.bf16.msra.mxu0 %v563
  %574 = vmatprep.subr.bf16.mxu0 0
  %575 = vmatpush1.bf16.msra.mxu0 %v562
  %576 = vmatprep.subr.bf16.mxu0 0
  %577 = vmatpush1.bf16.msra.mxu0 %v561
  %578 = vmatprep.subr.bf16.mxu0 0
  %579 = vmatpush1.bf16.msra.mxu0 %v560
  %580 = vmatprep.subr.bf16.mxu0 0
  %581 = vmatpush1.bf16.msra.mxu0 %v559
  %582 = vmatprep.subr.bf16.mxu0 0
  %583 = vmatpush1.bf16.msra.mxu0 %v558
  %584 = vmatprep.subr.bf16.mxu0 0
  %585 = vmatpush1.bf16.msra.mxu0 %v557
  %586 = vmatprep.subr.bf16.mxu0 0
  %587 = vmatpush1.bf16.msra.mxu0 %v556
  %588 = vmatprep.subr.bf16.mxu0 0
  %589 = vmatpush2.bf16.msra.mxu0 0
  %590 = vmatprep.subr.bf16.mxu0 0
  %591 = vmatpush2.bf16.msra.mxu0 0
  %592 = vmatprep.subr.bf16.mxu0 0
  %593 = vmatpush2.bf16.msra.mxu0 0
  %594 = vmatprep.subr.bf16.mxu0 0
  %595 = vmatpush2.bf16.msra.mxu0 0
  %596 = vmatprep.subr.bf16.mxu0 0
  %597 = vmatpush2.bf16.msra.mxu0 0
  %598 = vmatprep.subr.bf16.mxu0 0
  %599 = vmatpush2.bf16.msra.mxu0 0
  %600 = vmatprep.subr.bf16.mxu0 0
  %601 = vmatpush2.bf16.msra.mxu0 0
  %602 = vmatprep.subr.bf16.mxu0 0
  %603 = vmatpush2.bf16.msra.mxu0 0
  %604 = vmatprep.mubr.bf16.mxu0 0
  %605 = vmatmul.mubr.bf16.gmra.mxu0 %v500
  %v606 = vpop.f32.mrf.mxu0
  %v607 = vadd.f32 %v522, %v606
  %v608 = vpop.f32.mrf.mxu0
  %v609 = vpop.f32.mrf.mxu0
  %v610 = vpop.f32.mrf.mxu0
  %611 = vdwg.mxu0
  %612 = vst [vmem:[%s7] sm:$0xff] %v607
  // Predicated region
  $region30: #{net_forward.5} parent=0 // pred_check
    _
  $region31: #{net_forward.5} parent=0 // pred_check_branch
    %614 = sbr.rel (0) target = $region33
  $region32: #{net_forward.5} parent=0 // pred_region
    _
  $region33: #{net_forward.5} parent=0 // pred_fallthru
    _
  // Predicated region
  $region34: #{net_forward.5} parent=0 // pred_check
    _
  $region35: #{net_forward.5} parent=0 // pred_check_branch
    %616 = sbr.rel (0) target = $region37
  $region36: #{net_forward.5} parent=0 // pred_region
    _
  $region37: #{net_forward.5} parent=0 // pred_fallthru
    _

</llo_original>
